<compile_context>
chip_gen: v5e
topology: v5e:2x2
jax: 0.10.0
libtpu: 0.0.40
codegen_flags: <defaults>
</compile_context>

<pallas_src>
import jax
import jax.numpy as jnp
from jax.experimental import pallas as pl
from jax.experimental.pallas import tpu as pltpu


F_IN = 1000   # backbone feature width
HID = 256     # l1 output width
F_OUT = 1000  # l2 output width


def _round_up(n, m):
    return ((n + m - 1) // m) * m


def prepare_classifier_params(w1, b1, w2, b2):
    """One-time param prep (call at load time, NOT per forward):
       w1:[1000,256], b1:[256], w2:[256,1000], b2:[1000]  (all [in,out] layout)
       -> bf16 weights, f32 biases, output feature axis zero-padded 1000 -> 1024."""
    f_out_p = _round_up(F_OUT, 128)  # 1024
    w1_p = w1.astype(jnp.bfloat16)                                            # [1000, 256]
    b1_p = b1.astype(jnp.float32).reshape(1, HID)                             # [1, 256]
    w2_p = jnp.zeros((HID, f_out_p), jnp.bfloat16).at[:, :F_OUT].set(
        w2.astype(jnp.bfloat16))                                              # [256, 1024]
    b2_p = jnp.zeros((1, f_out_p), jnp.float32).at[0, :F_OUT].set(
        b2.astype(jnp.float32))                                               # [1, 1024]
    return w1_p, b1_p, w2_p, b2_p


def classifier_head_kernel(x_ref, w1_ref, b1_ref, w2_ref, b2_ref, o_ref):
    # x_ref : [TB, 1000] f32     w1_ref: [1000, 256] bf16   b1_ref: [1, 256]  f32
    # w2_ref: [256, 1024] bf16   b2_ref: [1, 1024]   f32    o_ref : [TB, 1024]
    # dropout(p=0.3) -> identity (inference semantics)
    x = x_ref[...].astype(jnp.bfloat16)

    # l1: x @ W1 + b1  (bf16 MXU matmul, f32 accumulation)
    h = jnp.dot(x, w1_ref[...], preferred_element_type=jnp.float32) + b1_ref[...]

    # SiLU: h * sigmoid(h)  (exp on EUP slot; elementwise mul on VPU)
    h = h * jax.nn.sigmoid(h)

    # l2: h @ W2 + b2  (second MXU pass in bf16, f32 accumulation; lane-dense 1024-wide store)
    y = jnp.dot(h.astype(jnp.bfloat16), w2_ref[...],
                preferred_element_type=jnp.float32) + b2_ref[...]

    o_ref[...] = y.astype(o_ref.dtype)


def _choose_batch_tile(B, tb_max):
    if B > tb_max:
        return tb_max                 # pad batch to a multiple of tb_max outside
    if B >= 16 and B % 16 == 0:
        return B // 2                 # two tiles, no padding -> v7x's 2 TCs can split the batch
    return B                          # single full-batch tile (block dim == full array dim)


def classifier_head(features, w1_p, b1_p, w2_p, b2_p, *, tb_max=512,
                    out_dtype=jnp.float32):
    """features: [B, 1000] f32. Params from prepare_classifier_params.
    Returns logits [B, 1000] in out_dtype."""
    B, f_in = features.shape
    assert f_in == F_IN and w1_p.shape == (F_IN, HID)
    f_out_p = w2_p.shape[1]           # 1024

    TB = _choose_batch_tile(B, tb_max)
    if B > tb_max:
        B_p = _round_up(B, TB)
        x_in = jnp.pad(features, ((0, B_p - B), (0, 0)))   # only when B > tb_max
    else:
        B_p = B
        x_in = features                                      # no extra activation pass
    num_tiles = B_p // TB

    out_elem_bytes = jnp.dtype(out_dtype).itemsize
    cost = pl.CostEstimate(
        flops=2 * B_p * (F_IN * HID + HID * f_out_p),
        transcendentals=B_p * HID,                           # sigmoid
        bytes_accessed=(B_p * F_IN * 4                       # x (f32 in)
                        + (F_IN * HID + HID * f_out_p) * 2   # bf16 weights
                        + (HID + f_out_p) * 4                # biases
                        + B_p * f_out_p * out_elem_bytes),   # logits out
    )

    out_p = pl.pallas_call(
        classifier_head_kernel,
        out_shape=jax.ShapeDtypeStruct((B_p, f_out_p), out_dtype),
        grid_spec=pltpu.PrefetchScalarGridSpec(
            num_scalar_prefetch=0,
            grid=(num_tiles,),
            in_specs=[
                pl.BlockSpec((TB, F_IN), lambda i: (i, 0)),      # x tile (pipelined)
                pl.BlockSpec((F_IN, HID), lambda i: (0, 0)),     # w1 (VMEM-resident)
                pl.BlockSpec((1, HID), lambda i: (0, 0)),        # b1 (resident)
                pl.BlockSpec((HID, f_out_p), lambda i: (0, 0)),  # w2 (resident)
                pl.BlockSpec((1, f_out_p), lambda i: (0, 0)),    # b2 (resident)
            ],
            out_specs=pl.BlockSpec((TB, f_out_p), lambda i: (i, 0)),
        ),
        compiler_params=pltpu.CompilerParams(
            # Batch tiles are independent. (On v7x with num_tiles >= 2, CORE_PARALLEL could be
            # used to force the two TensorCores to split this axis.)
            dimension_semantics=("parallel",),
        ),
        cost_estimate=cost,
    )(x_in, w1_p, b1_p, w2_p, b2_p)

    # Padded rows/columns are sliced off here; for large B let the consumer read the padded
    # [B_p, 1024] slab directly (or fuse) to avoid an extra pass over the logits.
    return out_p[:B, :F_OUT]


def _init_params(key):
    """Deterministic init mimicking nn.Linear defaults (U(-1/sqrt(fan_in), 1/sqrt(fan_in)))."""
    k1, k2, k3, k4 = jax.random.split(key, 4)
    bound1 = 1.0 / jnp.sqrt(1000.0)
    bound2 = 1.0 / jnp.sqrt(256.0)
    # stored as [in, out] (transposed vs. PyTorch's [out, in])
    w1 = jax.random.uniform(k1, (F_IN, HID), jnp.float32, -bound1, bound1)
    b1 = jax.random.uniform(k2, (HID,), jnp.float32, -bound1, bound1)
    w2 = jax.random.uniform(k3, (HID, F_OUT), jnp.float32, -bound2, bound2)
    b2 = jax.random.uniform(k4, (F_OUT,), jnp.float32, -bound2, bound2)
    return w1, b1, w2, b2


if __name__ == "__main__":
    key = jax.random.PRNGKey(0)
    kx, kp = jax.random.split(key)

    B = 2
    # Stand-in for the EfficientNet-b7 output (1000-dim classifier features).
    features = jax.random.normal(kx, (B, F_IN), dtype=jnp.float32)
    w1, b1, w2, b2 = _init_params(kp)

    # One-time param prep (hoisted out of the per-call path).
    w1_p, b1_p, w2_p, b2_p = jax.block_until_ready(
        prepare_classifier_params(w1, b1, w2, b2))

    out = classifier_head(features, w1_p, b1_p, w2_p, b2_p)
    out = jax.block_until_ready(out)

    # Pure-JAX reference mirroring the kernel's bf16 matmul-input / f32 accumulate precision.
    x_r = features.astype(jnp.bfloat16).astype(jnp.float32)
    w1_r = w1.astype(jnp.bfloat16).astype(jnp.float32)
    w2_r = w2.astype(jnp.bfloat16).astype(jnp.float32)
    h_ref = x_r @ w1_r + b1
    h_ref = h_ref * jax.nn.sigmoid(h_ref)
    h_ref = h_ref.astype(jnp.bfloat16).astype(jnp.float32)
    y_ref = h_ref @ w2_r + b2

    assert out.shape == (B, F_OUT)
    assert jnp.allclose(out, y_ref, atol=1e-2, rtol=1e-2), float(jnp.max(jnp.abs(out - y_ref)))

    print("KERNEL_OK")
</pallas_src>

<mosaic_0001>
module attributes {stable_mosaic.version = 11 : i64} {
  func.func @classifier_head_kernel(%arg0: i32, %arg1: memref<2x1000xf32, #tpu.memory_space<vmem>>, %arg2: memref<1000x256xbf16, #tpu.memory_space<vmem>>, %arg3: memref<1x256xf32, #tpu.memory_space<vmem>>, %arg4: memref<256x1024xbf16, #tpu.memory_space<vmem>>, %arg5: memref<1x1024xf32, #tpu.memory_space<vmem>>, %arg6: memref<2x1024xf32, #tpu.memory_space<vmem>>) attributes {dimension_semantics = [#tpu.dimension_semantics<parallel>], iteration_bounds = array<i64: 1>, scalar_prefetch = 0 : i64, scratch_operands = 0 : i64, tpu.core_type = #tpu.core_type<tc>, window_params = [{transform_indices = @transform_0, window_bounds = array<i64: 2, 1000>}, {pipeline_mode = #tpu.pipeline_mode<synchronous>, transform_indices = @transform_1, window_bounds = array<i64: 1000, 256>}, {pipeline_mode = #tpu.pipeline_mode<synchronous>, transform_indices = @transform_2, window_bounds = array<i64: 1, 256>}, {pipeline_mode = #tpu.pipeline_mode<synchronous>, transform_indices = @transform_3, window_bounds = array<i64: 256, 1024>}, {pipeline_mode = #tpu.pipeline_mode<synchronous>, transform_indices = @transform_4, window_bounds = array<i64: 1, 1024>}, {transform_indices = @transform_5, window_bounds = array<i64: 2, 1024>}]} {
    %c0 = arith.constant 0 : index
    %c0_0 = arith.constant 0 : index
    %0 = vector.load %arg1[%c0, %c0_0] : memref<2x1000xf32, #tpu.memory_space<vmem>>, vector<2x1000xf32>
    %1 = arith.truncf %0 : vector<2x1000xf32> to vector<2x1000xbf16>
    %c0_1 = arith.constant 0 : index
    %c0_2 = arith.constant 0 : index
    %2 = vector.load %arg2[%c0_1, %c0_2] : memref<1000x256xbf16, #tpu.memory_space<vmem>>, vector<1000x256xbf16>
    %cst = arith.constant dense<0.000000e+00> : vector<2x256xf32>
    %3 = tpu.matmul %1, %2, %cst {dimension_numbers = #tpu.dot_dimension_numbers<[1], [0], [0], [1], [0, 0, 1, 1], [], []>} : vector<2x1000xbf16>, vector<1000x256xbf16>, vector<2x256xf32> -> vector<2x256xf32>
    %c0_3 = arith.constant 0 : index
    %c0_4 = arith.constant 0 : index
    %4 = vector.load %arg3[%c0_3, %c0_4] : memref<1x256xf32, #tpu.memory_space<vmem>>, vector<1x256xf32>
    %5 = vector.broadcast %4 : vector<1x256xf32> to vector<2x256xf32>
    %6 = arith.addf %3, %5 : vector<2x256xf32>
    %7 = arith.negf %6 : vector<2x256xf32>
    %8 = math.exp %7 : vector<2x256xf32>
    %cst_5 = arith.constant 1.000000e+00 : f32
    %9 = vector.broadcast %cst_5 : f32 to vector<2x256xf32>
    %10 = arith.addf %9, %8 : vector<2x256xf32>
    %11 = arith.divf %9, %10 : vector<2x256xf32>
    %12 = arith.mulf %6, %11 : vector<2x256xf32>
    %13 = arith.truncf %12 : vector<2x256xf32> to vector<2x256xbf16>
    %c0_6 = arith.constant 0 : index
    %c0_7 = arith.constant 0 : index
    %14 = vector.load %arg4[%c0_6, %c0_7] : memref<256x1024xbf16, #tpu.memory_space<vmem>>, vector<256x1024xbf16>
    %cst_8 = arith.constant dense<0.000000e+00> : vector<2x1024xf32>
    %15 = tpu.matmul %13, %14, %cst_8 {dimension_numbers = #tpu.dot_dimension_numbers<[1], [0], [0], [1], [0, 0, 1, 1], [], []>} : vector<2x256xbf16>, vector<256x1024xbf16>, vector<2x1024xf32> -> vector<2x1024xf32>
    %c0_9 = arith.constant 0 : index
    %c0_10 = arith.constant 0 : index
    %16 = vector.load %arg5[%c0_9, %c0_10] : memref<1x1024xf32, #tpu.memory_space<vmem>>, vector<1x1024xf32>
    %17 = vector.broadcast %16 : vector<1x1024xf32> to vector<2x1024xf32>
    %18 = arith.addf %15, %17 : vector<2x1024xf32>
    %c0_11 = arith.constant 0 : index
    %c0_12 = arith.constant 0 : index
    %19 = vector.load %arg6[%c0_11, %c0_12] : memref<2x1024xf32, #tpu.memory_space<vmem>>, vector<2x1024xf32>
    tpu.vector_store %arg6[%c0_11, %c0_12], %18 {strides = array<i32>} : memref<2x1024xf32, #tpu.memory_space<vmem>>, vector<2x1024xf32>,
    return
  }
  func.func @transform_0(%arg0: i32) -> (i32, i32) {
    %c0_i32 = arith.constant 0 : i32
    %c0_i32_0 = arith.constant 0 : i32
    return %arg0, %c0_i32 : i32, i32
  }
  func.func @transform_1(%arg0: i32) -> (i32, i32) {
    %c0_i32 = arith.constant 0 : i32
    %c0_i32_0 = arith.constant 0 : i32
    %c0_i32_1 = arith.constant 0 : i32
    return %c0_i32, %c0_i32_0 : i32, i32
  }
  func.func @transform_2(%arg0: i32) -> (i32, i32) {
    %c0_i32 = arith.constant 0 : i32
    %c0_i32_0 = arith.constant 0 : i32
    %c0_i32_1 = arith.constant 0 : i32
    return %c0_i32, %c0_i32_0 : i32, i32
  }
  func.func @transform_3(%arg0: i32) -> (i32, i32) {
    %c0_i32 = arith.constant 0 : i32
    %c0_i32_0 = arith.constant 0 : i32
    %c0_i32_1 = arith.constant 0 : i32
    return %c0_i32, %c0_i32_0 : i32, i32
  }
  func.func @transform_4(%arg0: i32) -> (i32, i32) {
    %c0_i32 = arith.constant 0 : i32
    %c0_i32_0 = arith.constant 0 : i32
    %c0_i32_1 = arith.constant 0 : i32
    return %c0_i32, %c0_i32_0 : i32, i32
  }
  func.func @transform_5(%arg0: i32) -> (i32, i32) {
    %c0_i32 = arith.constant 0 : i32
    %c0_i32_0 = arith.constant 0 : i32
    return %arg0, %c0_i32 : i32, i32
  }
}

</mosaic_0001>

<llo_original>
// kernel: tpu_custom_call.1
$region0: #{tpu_custom_call.1}
  #allocation0 [shape = 'u32[]', space=smem, size = 0x4, offset = 0x4, fixed_abs, tag = 'smem constant byte address 0x4 - core index']
  #allocation1 [shape = 'u32[72,128]{1,0:T(1,128)}', space=vmem, size = 0x9000, scoped, tag = 'internal scratch']
  %s0 = inlined_call_operand.hbm [shape: f32[2,1000], index: 0, kind: input, shape index: {}]
  %s1 = inlined_call_operand.hbm [shape: bf16[1000,256], index: 1, kind: input, shape index: {}]
  %s2 = inlined_call_operand.hbm [shape: f32[1,256], index: 2, kind: input, shape index: {}]
  %s3 = inlined_call_operand.hbm [shape: bf16[256,1024], index: 3, kind: input, shape index: {}]
  %s4 = inlined_call_operand.hbm [shape: f32[1,1024], index: 4, kind: input, shape index: {}]
  %s5 = inlined_call_operand.hbm [shape: f32[2,1024], index: 5, kind: output, shape index: {}]
  %s6 = sld [smem:[#allocation0]]
  $region50: #{tpu_custom_call.1} parent=0
    _
  %s8 = ssub.s32 1, %s6
  %s9 = scalar_select 0, %s8, %s6
  $region1: #{tpu_custom_call.1} parent=0
    #allocation2 [shape = 'u8[8192]{0}', space=vmem, size = 0x2000, scoped, tag = 'input window, operand 0, single buffered']
    #allocation3 [shape = 's32[1]{0}', space=sflag, size = 0x4, scoped, tag = 'scoped memory for tpu_custom_call.1']
    #allocation4 [shape = 's32[1]{0}', space=sflag, size = 0x4, scoped, tag = 'scoped memory for tpu_custom_call.1']
    #allocation5 [shape = 'u8[512000]{0}', space=vmem, size = 0x7d000, scoped, tag = 'input window, operand 1, single buffered']
    #allocation6 [shape = 's32[1]{0}', space=sflag, size = 0x4, scoped, tag = 'scoped memory for tpu_custom_call.1']
    #allocation7 [shape = 'u8[1024]{0}', space=vmem, size = 0x400, scoped, tag = 'input window, operand 2, single buffered']
    #allocation8 [shape = 'u8[524288]{0}', space=vmem, size = 0x80000, scoped, tag = 'input window, operand 3, single buffered']
    #allocation9 [shape = 's32[1]{0}', space=sflag, size = 0x4, scoped, tag = 'scoped memory for tpu_custom_call.1']
    #allocation10 [shape = 'u8[4096]{0}', space=vmem, size = 0x1000, scoped, tag = 'input window, operand 4, single buffered']
    #allocation11 [shape = 'u8[8192]{0}', space=vmem, size = 0x2000, scoped, tag = 'output window, operand 0, single buffered']
    %10 = vsyncpa [#allocation3], 0
    %11 = vsyncpa [#allocation6], 0
    %12 = vsyncpa [#allocation9], 0
    %13 = vsyncpa [#allocation4], 0
    // Predicated region
    $region2: #{tpu_custom_call.1} parent=1 // pred_check
      _
    $region3: #{tpu_custom_call.1} parent=1 // pred_check_branch
      %15 = sbr.rel (0) target = $region5
    $region4: #{tpu_custom_call.1} parent=1 // pred_region
      %17 = vsyncadd [#allocation3], 0
      %s19 = sshll.u32 %s0, 4
      %s20 = int_to_ptr.hbm [resolvable:$true] %s19
      %s21 = sshll.u32 [#allocation2], 4
      %s22 = int_to_ptr.vmem [resolvable:$true] %s21
      %24 = dma.hbm_to_vmem [thread:$0]  %s20, 256, %s22, [#allocation3]
    $region5: #{tpu_custom_call.1} parent=1 // pred_fallthru
      _
    // Predicated region
    $region6: #{tpu_custom_call.1} parent=1 // pred_check
      _
    $region7: #{tpu_custom_call.1} parent=1 // pred_check_branch
      %26 = sbr.rel (0) target = $region9
    $region8: #{tpu_custom_call.1} parent=1 // pred_region
      %28 = vsyncadd [#allocation6], 0
      %s29 = sshll.u32 %s1, 4
      %s30 = int_to_ptr.hbm [resolvable:$true] %s29
      %s31 = sshll.u32 [#allocation5], 4
      %s32 = int_to_ptr.vmem [resolvable:$true] %s31
      %37 = dma.hbm_to_vmem [thread:$0]  %s30, 16000, %s32, [#allocation6], 128, 128, 8
    $region9: #{tpu_custom_call.1} parent=1 // pred_fallthru
      _
    // Predicated region
    $region10: #{tpu_custom_call.1} parent=1 // pred_check
      _
    $region11: #{tpu_custom_call.1} parent=1 // pred_check_branch
      %39 = sbr.rel (0) target = $region13
    $region12: #{tpu_custom_call.1} parent=1 // pred_region
      %41 = vsyncadd [#allocation6], 0
      %s43 = sshll.u32 %s2, 4
      %s44 = int_to_ptr.hbm [resolvable:$true] %s43
      %s45 = sshll.u32 [#allocation7], 4
      %s46 = int_to_ptr.vmem [resolvable:$true] %s45
      %48 = dma.hbm_to_vmem [thread:$0]  %s44, 32, %s46, [#allocation6]
    $region13: #{tpu_custom_call.1} parent=1 // pred_fallthru
      _
    // Predicated region
    $region14: #{tpu_custom_call.1} parent=1 // pred_check
      _
    $region15: #{tpu_custom_call.1} parent=1 // pred_check_branch
      %50 = sbr.rel (0) target = $region17
    $region16: #{tpu_custom_call.1} parent=1 // pred_region
      %52 = vsyncadd [#allocation9], 0
      %s53 = sshll.u32 %s3, 4
      %s54 = int_to_ptr.hbm [resolvable:$true] %s53
      %s55 = sshll.u32 [#allocation8], 4
      %s56 = int_to_ptr.vmem [resolvable:$true] %s55
      %61 = dma.hbm_to_vmem [thread:$0]  %s54, 16384, %s56, [#allocation9], 512, 512, 32
    $region17: #{tpu_custom_call.1} parent=1 // pred_fallthru
      _
    // Predicated region
    $region18: #{tpu_custom_call.1} parent=1 // pred_check
      _
    $region19: #{tpu_custom_call.1} parent=1 // pred_check_branch
      %63 = sbr.rel (0) target = $region21
    $region20: #{tpu_custom_call.1} parent=1 // pred_region
      %65 = vsyncadd [#allocation9], 0
      %s67 = sshll.u32 %s4, 4
      %s68 = int_to_ptr.hbm [resolvable:$true] %s67
      %s69 = sshll.u32 [#allocation10], 4
      %s70 = int_to_ptr.vmem [resolvable:$true] %s69
      %72 = dma.hbm_to_vmem [thread:$0]  %s68, 128, %s70, [#allocation9]
    $region21: #{tpu_custom_call.1} parent=1 // pred_fallthru
      _
    // Predicated region
    $region22: #{tpu_custom_call.1} parent=1 // pred_check
      _
    $region23: #{tpu_custom_call.1} parent=1 // pred_check_branch
      %74 = sbr.rel (0) target = $region25
    $region24: #{tpu_custom_call.1} parent=1 // pred_region
      %76 = dma.done [#allocation3], 256
    $region25: #{tpu_custom_call.1} parent=1 // pred_fallthru
      _
    // Predicated region
    $region26: #{tpu_custom_call.1} parent=1 // pred_check
      _
    $region27: #{tpu_custom_call.1} parent=1 // pred_check_branch
      %78 = sbr.rel (0) target = $region29
    $region28: #{tpu_custom_call.1} parent=1 // pred_region
      %80 = dma.done [#allocation6], 16000
    $region29: #{tpu_custom_call.1} parent=1 // pred_fallthru
      _
    // Predicated region
    $region30: #{tpu_custom_call.1} parent=1 // pred_check
      _
    $region31: #{tpu_custom_call.1} parent=1 // pred_check_branch
      %82 = sbr.rel (0) target = $region33
    $region32: #{tpu_custom_call.1} parent=1 // pred_region
      %84 = dma.done [#allocation6], 32
    $region33: #{tpu_custom_call.1} parent=1 // pred_fallthru
      _
    // Predicated region
    $region34: #{tpu_custom_call.1} parent=1 // pred_check
      _
    $region35: #{tpu_custom_call.1} parent=1 // pred_check_branch
      %86 = sbr.rel (0) target = $region37
    $region36: #{tpu_custom_call.1} parent=1 // pred_region
      %88 = dma.done [#allocation9], 16384
    $region37: #{tpu_custom_call.1} parent=1 // pred_fallthru
      _
    // Predicated region
    $region38: #{tpu_custom_call.1} parent=1 // pred_check
      _
    $region39: #{tpu_custom_call.1} parent=1 // pred_check_branch
      %90 = sbr.rel (0) target = $region41
    $region40: #{tpu_custom_call.1} parent=1 // pred_region
      %92 = dma.done [#allocation9], 128
    $region41: #{tpu_custom_call.1} parent=1 // pred_fallthru
      _
    %v94 = vld [vmem:[#allocation2] sm:$0xff]
    %v95 = vld [vmem:[#allocation2 + $0x8] sm:$0xff]
    %98 = vst [vmem:[#allocation1] ss:$4 sm:$0xff] %v94
    %s99 = scalar_lea.vmem [#allocation1], 32
    %100 = vst [vmem:[%s99] ss:$4 sm:$0xff] %v95
    %v101 = vld.sshfl [vmem:[#allocation1] sm:$0xff pattern:$0x73625140]
    %v102 = vld.sshfl [vmem:[#allocation1 + $0x8] sm:$0xff pattern:$0x73625140]
    %v103 = vld.sshfl [vmem:[#allocation1 + $0x10] sm:$0xff pattern:$0x73625140]
    %v104 = vld.sshfl [vmem:[#allocation1 + $0x18] sm:$0xff pattern:$0x73625140]
    %v105 = vld.sshfl [vmem:[#allocation1 + $0x20] sm:$0xff pattern:$0x73625140]
    %v106 = vld.sshfl [vmem:[#allocation1 + $0x28] sm:$0xff pattern:$0x73625140]
    %v107 = vld.sshfl [vmem:[#allocation1 + $0x30] sm:$0xff pattern:$0x73625140]
    %v108 = vld.sshfl [vmem:[#allocation1 + $0x38] sm:$0xff pattern:$0x73625140]
    %v117 = vpack.c.bf16 %v101, %v101
    %v118 = vpack.c.bf16 %v102, %v102
    %v119 = vpack.c.bf16 %v103, %v103
    %v120 = vpack.c.bf16 %v104, %v104
    %v121 = vpack.c.bf16 %v105, %v105
    %v122 = vpack.c.bf16 %v106, %v106
    %v123 = vpack.c.bf16 %v107, %v107
    %v124 = vpack.c.bf16 %v108, %v108
    %v125 = vld [vmem:[#allocation5] sm:$0xff]
    %v126 = vld [vmem:[#allocation5 + $0x8] sm:$0xff]
    %v127 = vld [vmem:[#allocation5 + $0x10] sm:$0xff]
    %v128 = vld [vmem:[#allocation5 + $0x18] sm:$0xff]
    %v129 = vld [vmem:[#allocation5 + $0x20] sm:$0xff]
    %v130 = vld [vmem:[#allocation5 + $0x28] sm:$0xff]
    %v131 = vld [vmem:[#allocation5 + $0x30] sm:$0xff]
    %v132 = vld [vmem:[#allocation5 + $0x38] sm:$0xff]
    %v133 = vld [vmem:[#allocation5 + $0x40] sm:$0xff]
    %v134 = vld [vmem:[#allocation5 + $0x48] sm:$0xff]
    %v135 = vld [vmem:[#allocation5 + $0x50] sm:$0xff]
    %v136 = vld [vmem:[#allocation5 + $0x58] sm:$0xff]
    %v137 = vld [vmem:[#allocation5 + $0x60] sm:$0xff]
    %v138 = vld [vmem:[#allocation5 + $0x68] sm:$0xff]
    %v139 = vld [vmem:[#allocation5 + $0x70] sm:$0xff]
    %v140 = vld [vmem:[#allocation5 + $0x78] sm:$0xff]
    %v141 = vld [vmem:[#allocation5 + $0x80] sm:$0xff]
    %v142 = vld [vmem:[#allocation5 + $0x88] sm:$0xff]
    %v143 = vld [vmem:[#allocation5 + $0x90] sm:$0xff]
    %v144 = vld [vmem:[#allocation5 + $0x98] sm:$0xff]
    %v145 = vld [vmem:[#allocation5 + $0xa0] sm:$0xff]
    %v146 = vld [vmem:[#allocation5 + $0xa8] sm:$0xff]
    %v147 = vld [vmem:[#allocation5 + $0xb0] sm:$0xff]
    %v148 = vld [vmem:[#allocation5 + $0xb8] sm:$0xff]
    %v149 = vld [vmem:[#allocation5 + $0xc0] sm:$0xff]
    %v150 = vld [vmem:[#allocation5 + $0xc8] sm:$0xff]
    %v151 = vld [vmem:[#allocation5 + $0xd0] sm:$0xff]
    %v152 = vld [vmem:[#allocation5 + $0xd8] sm:$0xff]
    %v153 = vld [vmem:[#allocation5 + $0xe0] sm:$0xff]
    %v154 = vld [vmem:[#allocation5 + $0xe8] sm:$0xff]
    %v155 = vld [vmem:[#allocation5 + $0xf0] sm:$0xff]
    %v156 = vld [vmem:[#allocation5 + $0xf8] sm:$0xff]
    %v157 = vld [vmem:[#allocation5 + $0x100] sm:$0xff]
    %v158 = vld [vmem:[#allocation5 + $0x108] sm:$0xff]
    %v159 = vld [vmem:[#allocation5 + $0x110] sm:$0xff]
    %v160 = vld [vmem:[#allocation5 + $0x118] sm:$0xff]
    %v161 = vld [vmem:[#allocation5 + $0x120] sm:$0xff]
    %v162 = vld [vmem:[#allocation5 + $0x128] sm:$0xff]
    %v163 = vld [vmem:[#allocation5 + $0x130] sm:$0xff]
    %v164 = vld [vmem:[#allocation5 + $0x138] sm:$0xff]
    %v165 = vld [vmem:[#allocation5 + $0x140] sm:$0xff]
    %v166 = vld [vmem:[#allocation5 + $0x148] sm:$0xff]
    %v167 = vld [vmem:[#allocation5 + $0x150] sm:$0xff]
    %v168 = vld [vmem:[#allocation5 + $0x158] sm:$0xff]
    %v169 = vld [vmem:[#allocation5 + $0x160] sm:$0xff]
    %v170 = vld [vmem:[#allocation5 + $0x168] sm:$0xff]
    %v171 = vld [vmem:[#allocation5 + $0x170] sm:$0xff]
    %v172 = vld [vmem:[#allocation5 + $0x178] sm:$0xff]
    %v173 = vld [vmem:[#allocation5 + $0x180] sm:$0xff]
    %v174 = vld [vmem:[#allocation5 + $0x188] sm:$0xff]
    %v175 = vld [vmem:[#allocation5 + $0x190] sm:$0xff]
    %v176 = vld [vmem:[#allocation5 + $0x198] sm:$0xff]
    %v177 = vld [vmem:[#allocation5 + $0x1a0] sm:$0xff]
    %v178 = vld [vmem:[#allocation5 + $0x1a8] sm:$0xff]
    %v179 = vld [vmem:[#allocation5 + $0x1b0] sm:$0xff]
    %v180 = vld [vmem:[#allocation5 + $0x1b8] sm:$0xff]
    %v181 = vld [vmem:[#allocation5 + $0x1c0] sm:$0xff]
    %v182 = vld [vmem:[#allocation5 + $0x1c8] sm:$0xff]
    %v183 = vld [vmem:[#allocation5 + $0x1d0] sm:$0xff]
    %v184 = vld [vmem:[#allocation5 + $0x1d8] sm:$0xff]
    %v185 = vld [vmem:[#allocation5 + $0x1e0] sm:$0xff]
    %v186 = vld [vmem:[#allocation5 + $0x1e8] sm:$0xff]
    %v187 = vld [vmem:[#allocation5 + $0x1f0] sm:$0xff]
    %v188 = vld [vmem:[#allocation5 + $0x1f8] sm:$0xff]
    %v189 = vld [vmem:[#allocation5 + $0x200] sm:$0xff]
    %v190 = vld [vmem:[#allocation5 + $0x208] sm:$0xff]
    %v191 = vld [vmem:[#allocation5 + $0x210] sm:$0xff]
    %v192 = vld [vmem:[#allocation5 + $0x218] sm:$0xff]
    %v193 = vld [vmem:[#allocation5 + $0x220] sm:$0xff]
    %v194 = vld [vmem:[#allocation5 + $0x228] sm:$0xff]
    %v195 = vld [vmem:[#allocation5 + $0x230] sm:$0xff]
    %v196 = vld [vmem:[#allocation5 + $0x238] sm:$0xff]
    %v197 = vld [vmem:[#allocation5 + $0x240] sm:$0xff]
    %v198 = vld [vmem:[#allocation5 + $0x248] sm:$0xff]
    %v199 = vld [vmem:[#allocation5 + $0x250] sm:$0xff]
    %v200 = vld [vmem:[#allocation5 + $0x258] sm:$0xff]
    %v201 = vld [vmem:[#allocation5 + $0x260] sm:$0xff]
    %v202 = vld [vmem:[#allocation5 + $0x268] sm:$0xff]
    %v203 = vld [vmem:[#allocation5 + $0x270] sm:$0xff]
    %v204 = vld [vmem:[#allocation5 + $0x278] sm:$0xff]
    %v205 = vld [vmem:[#allocation5 + $0x280] sm:$0xff]
    %v206 = vld [vmem:[#allocation5 + $0x288] sm:$0xff]
    %v207 = vld [vmem:[#allocation5 + $0x290] sm:$0xff]
    %v208 = vld [vmem:[#allocation5 + $0x298] sm:$0xff]
    %v209 = vld [vmem:[#allocation5 + $0x2a0] sm:$0xff]
    %v210 = vld [vmem:[#allocation5 + $0x2a8] sm:$0xff]
    %v211 = vld [vmem:[#allocation5 + $0x2b0] sm:$0xff]
    %v212 = vld [vmem:[#allocation5 + $0x2b8] sm:$0xff]
    %v213 = vld [vmem:[#allocation5 + $0x2c0] sm:$0xff]
    %v214 = vld [vmem:[#allocation5 + $0x2c8] sm:$0xff]
    %v215 = vld [vmem:[#allocation5 + $0x2d0] sm:$0xff]
    %v216 = vld [vmem:[#allocation5 + $0x2d8] sm:$0xff]
    %v217 = vld [vmem:[#allocation5 + $0x2e0] sm:$0xff]
    %v218 = vld [vmem:[#allocation5 + $0x2e8] sm:$0xff]
    %v219 = vld [vmem:[#allocation5 + $0x2f0] sm:$0xff]
    %v220 = vld [vmem:[#allocation5 + $0x2f8] sm:$0xff]
    %v221 = vld [vmem:[#allocation5 + $0x300] sm:$0xff]
    %v222 = vld [vmem:[#allocation5 + $0x308] sm:$0xff]
    %v223 = vld [vmem:[#allocation5 + $0x310] sm:$0xff]
    %v224 = vld [vmem:[#allocation5 + $0x318] sm:$0xff]
    %v225 = vld [vmem:[#allocation5 + $0x320] sm:$0xff]
    %v226 = vld [vmem:[#allocation5 + $0x328] sm:$0xff]
    %v227 = vld [vmem:[#allocation5 + $0x330] sm:$0xff]
    %v228 = vld [vmem:[#allocation5 + $0x338] sm:$0xff]
    %v229 = vld [vmem:[#allocation5 + $0x340] sm:$0xff]
    %v230 = vld [vmem:[#allocation5 + $0x348] sm:$0xff]
    %v231 = vld [vmem:[#allocation5 + $0x350] sm:$0xff]
    %v232 = vld [vmem:[#allocation5 + $0x358] sm:$0xff]
    %v233 = vld [vmem:[#allocation5 + $0x360] sm:$0xff]
    %v234 = vld [vmem:[#allocation5 + $0x368] sm:$0xff]
    %v235 = vld [vmem:[#allocation5 + $0x370] sm:$0xff]
    %v236 = vld [vmem:[#allocation5 + $0x378] sm:$0xff]
    %v237 = vld [vmem:[#allocation5 + $0x380] sm:$0xff]
    %v238 = vld [vmem:[#allocation5 + $0x388] sm:$0xff]
    %v239 = vld [vmem:[#allocation5 + $0x390] sm:$0xff]
    %v240 = vld [vmem:[#allocation5 + $0x398] sm:$0xff]
    %v241 = vld [vmem:[#allocation5 + $0x3a0] sm:$0xff]
    %v242 = vld [vmem:[#allocation5 + $0x3a8] sm:$0xff]
    %v243 = vld [vmem:[#allocation5 + $0x3b0] sm:$0xff]
    %v244 = vld [vmem:[#allocation5 + $0x3b8] sm:$0xff]
    %v245 = vld [vmem:[#allocation5 + $0x3c0] sm:$0xff]
    %v246 = vld [vmem:[#allocation5 + $0x3c8] sm:$0xff]
    %v247 = vld [vmem:[#allocation5 + $0x3d0] sm:$0xff]
    %v248 = vld [vmem:[#allocation5 + $0x3d8] sm:$0xff]
    %v249 = vld [vmem:[#allocation5 + $0x3e0] sm:$0xff]
    %v250 = vld [vmem:[#allocation7] sm:$0x3]
    %v252 = vperm.slane %v250, 0
    %v253 = vperm.slane %v250, 1
    %v381 = vunpack.c.l.b16 %v125
    %v382 = vunpack.c.h.b16 %v125
    %v383 = vunpack.c.l.b16 %v126
    %v384 = vunpack.c.h.b16 %v126
    %v385 = vunpack.c.l.b16 %v127
    %v386 = vunpack.c.h.b16 %v127
    %v387 = vunpack.c.l.b16 %v128
    %v388 = vunpack.c.h.b16 %v128
    %v389 = vunpack.c.l.b16 %v129
    %v390 = vunpack.c.h.b16 %v129
    %v391 = vunpack.c.l.b16 %v130
    %v392 = vunpack.c.h.b16 %v130
    %v393 = vunpack.c.l.b16 %v131
    %v394 = vunpack.c.h.b16 %v131
    %v395 = vunpack.c.l.b16 %v132
    %v396 = vunpack.c.h.b16 %v132
    %v397 = vunpack.c.l.b16 %v133
    %v398 = vunpack.c.h.b16 %v133
    %v399 = vunpack.c.l.b16 %v134
    %v400 = vunpack.c.h.b16 %v134
    %v401 = vunpack.c.l.b16 %v135
    %v402 = vunpack.c.h.b16 %v135
    %v403 = vunpack.c.l.b16 %v136
    %v404 = vunpack.c.h.b16 %v136
    %v405 = vunpack.c.l.b16 %v137
    %v406 = vunpack.c.h.b16 %v137
    %v407 = vunpack.c.l.b16 %v138
    %v408 = vunpack.c.h.b16 %v138
    %v409 = vunpack.c.l.b16 %v139
    %v410 = vunpack.c.h.b16 %v139
    %v411 = vunpack.c.l.b16 %v140
    %v412 = vunpack.c.h.b16 %v140
    %v413 = vunpack.c.l.b16 %v141
    %v414 = vunpack.c.h.b16 %v141
    %v415 = vunpack.c.l.b16 %v142
    %v416 = vunpack.c.h.b16 %v142
    %v417 = vunpack.c.l.b16 %v143
    %v418 = vunpack.c.h.b16 %v143
    %v419 = vunpack.c.l.b16 %v144
    %v420 = vunpack.c.h.b16 %v144
    %v421 = vunpack.c.l.b16 %v145
    %v422 = vunpack.c.h.b16 %v145
    %v423 = vunpack.c.l.b16 %v146
    %v424 = vunpack.c.h.b16 %v146
    %v425 = vunpack.c.l.b16 %v147
    %v426 = vunpack.c.h.b16 %v147
    %v427 = vunpack.c.l.b16 %v148
    %v428 = vunpack.c.h.b16 %v148
    %v429 = vunpack.c.l.b16 %v149
    %v430 = vunpack.c.h.b16 %v149
    %v431 = vunpack.c.l.b16 %v150
    %v432 = vunpack.c.h.b16 %v150
    %v433 = vunpack.c.l.b16 %v151
    %v434 = vunpack.c.h.b16 %v151
    %v435 = vunpack.c.l.b16 %v152
    %v436 = vunpack.c.h.b16 %v152
    %v437 = vunpack.c.l.b16 %v153
    %v438 = vunpack.c.h.b16 %v153
    %v439 = vunpack.c.l.b16 %v154
    %v440 = vunpack.c.h.b16 %v154
    %v441 = vunpack.c.l.b16 %v155
    %v442 = vunpack.c.h.b16 %v155
    %v443 = vunpack.c.l.b16 %v156
    %v444 = vunpack.c.h.b16 %v156
    %v445 = vunpack.c.l.b16 %v157
    %v446 = vunpack.c.h.b16 %v157
    %v447 = vunpack.c.l.b16 %v158
    %v448 = vunpack.c.h.b16 %v158
    %v449 = vunpack.c.l.b16 %v159
    %v450 = vunpack.c.h.b16 %v159
    %v451 = vunpack.c.l.b16 %v160
    %v452 = vunpack.c.h.b16 %v160
    %v453 = vunpack.c.l.b16 %v161
    %v454 = vunpack.c.h.b16 %v161
    %v455 = vunpack.c.l.b16 %v162
    %v456 = vunpack.c.h.b16 %v162
    %v457 = vunpack.c.l.b16 %v163
    %v458 = vunpack.c.h.b16 %v163
    %v459 = vunpack.c.l.b16 %v164
    %v460 = vunpack.c.h.b16 %v164
    %v461 = vunpack.c.l.b16 %v165
    %v462 = vunpack.c.h.b16 %v165
    %v463 = vunpack.c.l.b16 %v166
    %v464 = vunpack.c.h.b16 %v166
    %v465 = vunpack.c.l.b16 %v167
    %v466 = vunpack.c.h.b16 %v167
    %v467 = vunpack.c.l.b16 %v168
    %v468 = vunpack.c.h.b16 %v168
    %v469 = vunpack.c.l.b16 %v169
    %v470 = vunpack.c.h.b16 %v169
    %v471 = vunpack.c.l.b16 %v170
    %v472 = vunpack.c.h.b16 %v170
    %v473 = vunpack.c.l.b16 %v171
    %v474 = vunpack.c.h.b16 %v171
    %v475 = vunpack.c.l.b16 %v172
    %v476 = vunpack.c.h.b16 %v172
    %v477 = vunpack.c.l.b16 %v173
    %v478 = vunpack.c.h.b16 %v173
    %v479 = vunpack.c.l.b16 %v174
    %v480 = vunpack.c.h.b16 %v174
    %v481 = vunpack.c.l.b16 %v175
    %v482 = vunpack.c.h.b16 %v175
    %v483 = vunpack.c.l.b16 %v176
    %v484 = vunpack.c.h.b16 %v176
    %v485 = vunpack.c.l.b16 %v177
    %v486 = vunpack.c.h.b16 %v177
    %v487 = vunpack.c.l.b16 %v178
    %v488 = vunpack.c.h.b16 %v178
    %v489 = vunpack.c.l.b16 %v179
    %v490 = vunpack.c.h.b16 %v179
    %v491 = vunpack.c.l.b16 %v180
    %v492 = vunpack.c.h.b16 %v180
    %v493 = vunpack.c.l.b16 %v181
    %v494 = vunpack.c.h.b16 %v181
    %v495 = vunpack.c.l.b16 %v182
    %v496 = vunpack.c.h.b16 %v182
    %v497 = vunpack.c.l.b16 %v183
    %v498 = vunpack.c.h.b16 %v183
    %v499 = vunpack.c.l.b16 %v184
    %v500 = vunpack.c.h.b16 %v184
    %v501 = vunpack.c.l.b16 %v185
    %v502 = vunpack.c.h.b16 %v185
    %v503 = vunpack.c.l.b16 %v186
    %v504 = vunpack.c.h.b16 %v186
    %v505 = vunpack.c.l.b16 %v187
    %v506 = vunpack.c.h.b16 %v187
    %v507 = vunpack.c.l.b16 %v188
    %v508 = vunpack.c.h.b16 %v188
    %v509 = vunpack.c.l.b16 %v189
    %v510 = vunpack.c.h.b16 %v189
    %v511 = vunpack.c.l.b16 %v190
    %v512 = vunpack.c.h.b16 %v190
    %v513 = vunpack.c.l.b16 %v191
    %v514 = vunpack.c.h.b16 %v191
    %v515 = vunpack.c.l.b16 %v192
    %v516 = vunpack.c.h.b16 %v192
    %v517 = vunpack.c.l.b16 %v193
    %v518 = vunpack.c.h.b16 %v193
    %v519 = vunpack.c.l.b16 %v194
    %v520 = vunpack.c.h.b16 %v194
    %v521 = vunpack.c.l.b16 %v195
    %v522 = vunpack.c.h.b16 %v195
    %v523 = vunpack.c.l.b16 %v196
    %v524 = vunpack.c.h.b16 %v196
    %v525 = vunpack.c.l.b16 %v197
    %v526 = vunpack.c.h.b16 %v197
    %v527 = vunpack.c.l.b16 %v198
    %v528 = vunpack.c.h.b16 %v198
    %v529 = vunpack.c.l.b16 %v199
    %v530 = vunpack.c.h.b16 %v199
    %v531 = vunpack.c.l.b16 %v200
    %v532 = vunpack.c.h.b16 %v200
    %v533 = vunpack.c.l.b16 %v201
    %v534 = vunpack.c.h.b16 %v201
    %v535 = vunpack.c.l.b16 %v202
    %v536 = vunpack.c.h.b16 %v202
    %v537 = vunpack.c.l.b16 %v203
    %v538 = vunpack.c.h.b16 %v203
    %v539 = vunpack.c.l.b16 %v204
    %v540 = vunpack.c.h.b16 %v204
    %v541 = vunpack.c.l.b16 %v205
    %v542 = vunpack.c.h.b16 %v205
    %v543 = vunpack.c.l.b16 %v206
    %v544 = vunpack.c.h.b16 %v206
    %v545 = vunpack.c.l.b16 %v207
    %v546 = vunpack.c.h.b16 %v207
    %v547 = vunpack.c.l.b16 %v208
    %v548 = vunpack.c.h.b16 %v208
    %v549 = vunpack.c.l.b16 %v209
    %v550 = vunpack.c.h.b16 %v209
    %v551 = vunpack.c.l.b16 %v210
    %v552 = vunpack.c.h.b16 %v210
    %v553 = vunpack.c.l.b16 %v211
    %v554 = vunpack.c.h.b16 %v211
    %v555 = vunpack.c.l.b16 %v212
    %v556 = vunpack.c.h.b16 %v212
    %v557 = vunpack.c.l.b16 %v213
    %v558 = vunpack.c.h.b16 %v213
    %v559 = vunpack.c.l.b16 %v214
    %v560 = vunpack.c.h.b16 %v214
    %v561 = vunpack.c.l.b16 %v215
    %v562 = vunpack.c.h.b16 %v215
    %v563 = vunpack.c.l.b16 %v216
    %v564 = vunpack.c.h.b16 %v216
    %v565 = vunpack.c.l.b16 %v217
    %v566 = vunpack.c.h.b16 %v217
    %v567 = vunpack.c.l.b16 %v218
    %v568 = vunpack.c.h.b16 %v218
    %v569 = vunpack.c.l.b16 %v219
    %v570 = vunpack.c.h.b16 %v219
    %v571 = vunpack.c.l.b16 %v220
    %v572 = vunpack.c.h.b16 %v220
    %v573 = vunpack.c.l.b16 %v221
    %v574 = vunpack.c.h.b16 %v221
    %v575 = vunpack.c.l.b16 %v222
    %v576 = vunpack.c.h.b16 %v222
    %v577 = vunpack.c.l.b16 %v223
    %v578 = vunpack.c.h.b16 %v223
    %v579 = vunpack.c.l.b16 %v224
    %v580 = vunpack.c.h.b16 %v224
    %v581 = vunpack.c.l.b16 %v225
    %v582 = vunpack.c.h.b16 %v225
    %v583 = vunpack.c.l.b16 %v226
    %v584 = vunpack.c.h.b16 %v226
    %v585 = vunpack.c.l.b16 %v227
    %v586 = vunpack.c.h.b16 %v227
    %v587 = vunpack.c.l.b16 %v228
    %v588 = vunpack.c.h.b16 %v228
    %v589 = vunpack.c.l.b16 %v229
    %v590 = vunpack.c.h.b16 %v229
    %v591 = vunpack.c.l.b16 %v230
    %v592 = vunpack.c.h.b16 %v230
    %v593 = vunpack.c.l.b16 %v231
    %v594 = vunpack.c.h.b16 %v231
    %v595 = vunpack.c.l.b16 %v232
    %v596 = vunpack.c.h.b16 %v232
    %v597 = vunpack.c.l.b16 %v233
    %v598 = vunpack.c.h.b16 %v233
    %v599 = vunpack.c.l.b16 %v234
    %v600 = vunpack.c.h.b16 %v234
    %v601 = vunpack.c.l.b16 %v235
    %v602 = vunpack.c.h.b16 %v235
    %v603 = vunpack.c.l.b16 %v236
    %v604 = vunpack.c.h.b16 %v236
    %v605 = vunpack.c.l.b16 %v237
    %v606 = vunpack.c.h.b16 %v237
    %v607 = vunpack.c.l.b16 %v238
    %v608 = vunpack.c.h.b16 %v238
    %v609 = vunpack.c.l.b16 %v239
    %v610 = vunpack.c.h.b16 %v239
    %v611 = vunpack.c.l.b16 %v240
    %v612 = vunpack.c.h.b16 %v240
    %v613 = vunpack.c.l.b16 %v241
    %v614 = vunpack.c.h.b16 %v241
    %v615 = vunpack.c.l.b16 %v242
    %v616 = vunpack.c.h.b16 %v242
    %v617 = vunpack.c.l.b16 %v243
    %v618 = vunpack.c.h.b16 %v243
    %v619 = vunpack.c.l.b16 %v244
    %v620 = vunpack.c.h.b16 %v244
    %v621 = vunpack.c.l.b16 %v245
    %v622 = vunpack.c.h.b16 %v245
    %v623 = vunpack.c.l.b16 %v246
    %v624 = vunpack.c.h.b16 %v246
    %v625 = vunpack.c.l.b16 %v247
    %v626 = vunpack.c.h.b16 %v247
    %v627 = vunpack.c.l.b16 %v248
    %v628 = vunpack.c.h.b16 %v248
    %v629 = vunpack.c.l.b16 %v249
    %v630 = vunpack.c.h.b16 %v249
    %v631 = vpack.c.b16 %v383, %v381
    %v632 = vpack.c.b16 %v384, %v382
    %v633 = vpack.c.b16 %v387, %v385
    %v634 = vpack.c.b16 %v388, %v386
    %v635 = vpack.c.b16 %v391, %v389
    %v636 = vpack.c.b16 %v392, %v390
    %v637 = vpack.c.b16 %v395, %v393
    %v638 = vpack.c.b16 %v396, %v394
    %v639 = vpack.c.b16 %v399, %v397
    %v640 = vpack.c.b16 %v400, %v398
    %v641 = vpack.c.b16 %v403, %v401
    %v642 = vpack.c.b16 %v404, %v402
    %v643 = vpack.c.b16 %v407, %v405
    %v644 = vpack.c.b16 %v408, %v406
    %v645 = vpack.c.b16 %v411, %v409
    %v646 = vpack.c.b16 %v412, %v410
    %v647 = vpack.c.b16 %v415, %v413
    %v648 = vpack.c.b16 %v416, %v414
    %v649 = vpack.c.b16 %v419, %v417
    %v650 = vpack.c.b16 %v420, %v418
    %v651 = vpack.c.b16 %v423, %v421
    %v652 = vpack.c.b16 %v424, %v422
    %v653 = vpack.c.b16 %v427, %v425
    %v654 = vpack.c.b16 %v428, %v426
    %v655 = vpack.c.b16 %v431, %v429
    %v656 = vpack.c.b16 %v432, %v430
    %v657 = vpack.c.b16 %v435, %v433
    %v658 = vpack.c.b16 %v436, %v434
    %v659 = vpack.c.b16 %v439, %v437
    %v660 = vpack.c.b16 %v440, %v438
    %v661 = vpack.c.b16 %v443, %v441
    %v662 = vpack.c.b16 %v444, %v442
    %v663 = vpack.c.b16 %v447, %v445
    %v664 = vpack.c.b16 %v448, %v446
    %v665 = vpack.c.b16 %v451, %v449
    %v666 = vpack.c.b16 %v452, %v450
    %v667 = vpack.c.b16 %v455, %v453
    %v668 = vpack.c.b16 %v456, %v454
    %v669 = vpack.c.b16 %v459, %v457
    %v670 = vpack.c.b16 %v460, %v458
    %v671 = vpack.c.b16 %v463, %v461
    %v672 = vpack.c.b16 %v464, %v462
    %v673 = vpack.c.b16 %v467, %v465
    %v674 = vpack.c.b16 %v468, %v466
    %v675 = vpack.c.b16 %v471, %v469
    %v676 = vpack.c.b16 %v472, %v470
    %v677 = vpack.c.b16 %v475, %v473
    %v678 = vpack.c.b16 %v476, %v474
    %v679 = vpack.c.b16 %v479, %v477
    %v680 = vpack.c.b16 %v480, %v478
    %v681 = vpack.c.b16 %v483, %v481
    %v682 = vpack.c.b16 %v484, %v482
    %v683 = vpack.c.b16 %v487, %v485
    %v684 = vpack.c.b16 %v488, %v486
    %v685 = vpack.c.b16 %v491, %v489
    %v686 = vpack.c.b16 %v492, %v490
    %v687 = vpack.c.b16 %v495, %v493
    %v688 = vpack.c.b16 %v496, %v494
    %v689 = vpack.c.b16 %v499, %v497
    %v690 = vpack.c.b16 %v500, %v498
    %v691 = vpack.c.b16 %v503, %v501
    %v692 = vpack.c.b16 %v504, %v502
    %v693 = vpack.c.b16 %v507, %v505
    %v694 = vpack.c.b16 %v508, %v506
    %v695 = vpack.c.b16 %v511, %v509
    %v696 = vpack.c.b16 %v512, %v510
    %v697 = vpack.c.b16 %v515, %v513
    %v698 = vpack.c.b16 %v516, %v514
    %v699 = vpack.c.b16 %v519, %v517
    %v700 = vpack.c.b16 %v520, %v518
    %v701 = vpack.c.b16 %v523, %v521
    %v702 = vpack.c.b16 %v524, %v522
    %v703 = vpack.c.b16 %v527, %v525
    %v704 = vpack.c.b16 %v528, %v526
    %v705 = vpack.c.b16 %v531, %v529
    %v706 = vpack.c.b16 %v532, %v530
    %v707 = vpack.c.b16 %v535, %v533
    %v708 = vpack.c.b16 %v536, %v534
    %v709 = vpack.c.b16 %v539, %v537
    %v710 = vpack.c.b16 %v540, %v538
    %v711 = vpack.c.b16 %v543, %v541
    %v712 = vpack.c.b16 %v544, %v542
    %v713 = vpack.c.b16 %v547, %v545
    %v714 = vpack.c.b16 %v548, %v546
    %v715 = vpack.c.b16 %v551, %v549
    %v716 = vpack.c.b16 %v552, %v550
    %v717 = vpack.c.b16 %v555, %v553
    %v718 = vpack.c.b16 %v556, %v554
    %v719 = vpack.c.b16 %v559, %v557
    %v720 = vpack.c.b16 %v560, %v558
    %v721 = vpack.c.b16 %v563, %v561
    %v722 = vpack.c.b16 %v564, %v562
    %v723 = vpack.c.b16 %v567, %v565
    %v724 = vpack.c.b16 %v568, %v566
    %v725 = vpack.c.b16 %v571, %v569
    %v726 = vpack.c.b16 %v572, %v570
    %v727 = vpack.c.b16 %v575, %v573
    %v728 = vpack.c.b16 %v576, %v574
    %v729 = vpack.c.b16 %v579, %v577
    %v730 = vpack.c.b16 %v580, %v578
    %v731 = vpack.c.b16 %v583, %v581
    %v732 = vpack.c.b16 %v584, %v582
    %v733 = vpack.c.b16 %v587, %v585
    %v734 = vpack.c.b16 %v588, %v586
    %v735 = vpack.c.b16 %v591, %v589
    %v736 = vpack.c.b16 %v592, %v590
    %v737 = vpack.c.b16 %v595, %v593
    %v738 = vpack.c.b16 %v596, %v594
    %v739 = vpack.c.b16 %v599, %v597
    %v740 = vpack.c.b16 %v600, %v598
    %v741 = vpack.c.b16 %v603, %v601
    %v742 = vpack.c.b16 %v604, %v602
    %v743 = vpack.c.b16 %v607, %v605
    %v744 = vpack.c.b16 %v608, %v606
    %v745 = vpack.c.b16 %v611, %v609
    %v746 = vpack.c.b16 %v612, %v610
    %v747 = vpack.c.b16 %v615, %v613
    %v748 = vpack.c.b16 %v616, %v614
    %v749 = vpack.c.b16 %v619, %v617
    %v750 = vpack.c.b16 %v620, %v618
    %v751 = vpack.c.b16 %v623, %v621
    %v752 = vpack.c.b16 %v624, %v622
    %v753 = vpack.c.b16 %v627, %v625
    %v754 = vpack.c.b16 %v628, %v626
    %v755 = vpack.c.b16 %v629, %v629
    %v756 = vpack.c.b16 %v630, %v630
    %vm881 = vcmask 850944
    %v883 = vsel %vm881, %v124, 0
    %vm885 = vcmask 1043456
    %v887 = vsel %vm885, %v755, 0
    %v890 = vsel %vm885, %v756, 0
    %892 = vmatpush.bf16.msra.mxu0 %v645
    %893 = vmatpush.bf16.msra.mxu0 %v643
    %894 = vmatpush.bf16.msra.mxu0 %v641
    %895 = vmatpush.bf16.msra.mxu0 %v639
    %896 = vmatpush.bf16.msra.mxu0 %v637
    %897 = vmatpush.bf16.msra.mxu0 %v635
    %898 = vmatpush.bf16.msra.mxu0 %v633
    %899 = vmatpush.bf16.msra.mxu0 %v631
    %900 = vmatmul.bf16.gmra.mxu0 %v117
    %v901 = vpop.f32.mrf.mxu0
    %v902 = vadd.f32 %v252, %v901
    %v903 = vpop.f32.mrf.mxu0
    %904 = vdwg.mxu0
    %905 = vmatpush.bf16.msra.mxu0 %v661
    %906 = vmatpush.bf16.msra.mxu0 %v659
    %907 = vmatpush.bf16.msra.mxu0 %v657
    %908 = vmatpush.bf16.msra.mxu0 %v655
    %909 = vmatpush.bf16.msra.mxu0 %v653
    %910 = vmatpush.bf16.msra.mxu0 %v651
    %911 = vmatpush.bf16.msra.mxu0 %v649
    %912 = vmatpush.bf16.msra.mxu0 %v647
    %913 = vmatmul.bf16.gmra.mxu0 %v118
    %v914 = vpop.f32.mrf.mxu0
    %v915 = vadd.f32 %v902, %v914
    %v916 = vpop.f32.mrf.mxu0
    %917 = vdwg.mxu0
    %918 = vmatpush.bf16.msra.mxu0 %v677
    %919 = vmatpush.bf16.msra.mxu0 %v675
    %920 = vmatpush.bf16.msra.mxu0 %v673
    %921 = vmatpush.bf16.msra.mxu0 %v671
    %922 = vmatpush.bf16.msra.mxu0 %v669
    %923 = vmatpush.bf16.msra.mxu0 %v667
    %924 = vmatpush.bf16.msra.mxu0 %v665
    %925 = vmatpush.bf16.msra.mxu0 %v663
    %926 = vmatmul.bf16.gmra.mxu0 %v119
    %v927 = vpop.f32.mrf.mxu0
    %v928 = vadd.f32 %v915, %v927
    %v929 = vpop.f32.mrf.mxu0
    %930 = vdwg.mxu0
    %931 = vmatpush.bf16.msra.mxu0 %v693
    %932 = vmatpush.bf16.msra.mxu0 %v691
    %933 = vmatpush.bf16.msra.mxu0 %v689
    %934 = vmatpush.bf16.msra.mxu0 %v687
    %935 = vmatpush.bf16.msra.mxu0 %v685
    %936 = vmatpush.bf16.msra.mxu0 %v683
    %937 = vmatpush.bf16.msra.mxu0 %v681
    %938 = vmatpush.bf16.msra.mxu0 %v679
    %939 = vmatmul.bf16.gmra.mxu0 %v120
    %v940 = vpop.f32.mrf.mxu0
    %v941 = vadd.f32 %v928, %v940
    %v942 = vpop.f32.mrf.mxu0
    %943 = vdwg.mxu0
    %944 = vmatpush.bf16.msra.mxu0 %v709
    %945 = vmatpush.bf16.msra.mxu0 %v707
    %946 = vmatpush.bf16.msra.mxu0 %v705
    %947 = vmatpush.bf16.msra.mxu0 %v703
    %948 = vmatpush.bf16.msra.mxu0 %v701
    %949 = vmatpush.bf16.msra.mxu0 %v699
    %950 = vmatpush.bf16.msra.mxu0 %v697
    %951 = vmatpush.bf16.msra.mxu0 %v695
    %952 = vmatmul.bf16.gmra.mxu0 %v121
    %v953 = vpop.f32.mrf.mxu0
    %v954 = vadd.f32 %v941, %v953
    %v955 = vpop.f32.mrf.mxu0
    %956 = vdwg.mxu0
    %957 = vmatpush.bf16.msra.mxu0 %v725
    %958 = vmatpush.bf16.msra.mxu0 %v723
    %959 = vmatpush.bf16.msra.mxu0 %v721
    %960 = vmatpush.bf16.msra.mxu0 %v719
    %961 = vmatpush.bf16.msra.mxu0 %v717
    %962 = vmatpush.bf16.msra.mxu0 %v715
    %963 = vmatpush.bf16.msra.mxu0 %v713
    %964 = vmatpush.bf16.msra.mxu0 %v711
    %965 = vmatmul.bf16.gmra.mxu0 %v122
    %v966 = vpop.f32.mrf.mxu0
    %v967 = vadd.f32 %v954, %v966
    %v968 = vpop.f32.mrf.mxu0
    %969 = vdwg.mxu0
    %970 = vmatpush.bf16.msra.mxu0 %v741
    %971 = vmatpush.bf16.msra.mxu0 %v739
    %972 = vmatpush.bf16.msra.mxu0 %v737
    %973 = vmatpush.bf16.msra.mxu0 %v735
    %974 = vmatpush.bf16.msra.mxu0 %v733
    %975 = vmatpush.bf16.msra.mxu0 %v731
    %976 = vmatpush.bf16.msra.mxu0 %v729
    %977 = vmatpush.bf16.msra.mxu0 %v727
    %978 = vmatmul.bf16.gmra.mxu0 %v123
    %v979 = vpop.f32.mrf.mxu0
    %v980 = vadd.f32 %v967, %v979
    %v981 = vpop.f32.mrf.mxu0
    %982 = vdwg.mxu0
    %983 = vmatpush.bf16.msra.mxu0 0
    %984 = vmatpush.bf16.msra.mxu0 %v887
    %985 = vmatpush.bf16.msra.mxu0 %v753
    %986 = vmatpush.bf16.msra.mxu0 %v751
    %987 = vmatpush.bf16.msra.mxu0 %v749
    %988 = vmatpush.bf16.msra.mxu0 %v747
    %989 = vmatpush.bf16.msra.mxu0 %v745
    %990 = vmatpush.bf16.msra.mxu0 %v743
    %991 = vmatmul.bf16.gmra.mxu0 %v883
    %v992 = vpop.f32.mrf.mxu0
    %v993 = vadd.f32 %v980, %v992
    %v994 = vpop.f32.mrf.mxu0
    %995 = vdwg.mxu0
    %996 = vmatpush.bf16.msra.mxu0 %v646
    %997 = vmatpush.bf16.msra.mxu0 %v644
    %998 = vmatpush.bf16.msra.mxu0 %v642
    %999 = vmatpush.bf16.msra.mxu0 %v640
    %1000 = vmatpush.bf16.msra.mxu0 %v638
    %1001 = vmatpush.bf16.msra.mxu0 %v636
    %1002 = vmatpush.bf16.msra.mxu0 %v634
    %1003 = vmatpush.bf16.msra.mxu0 %v632
    %1004 = vmatmul.bf16.gmra.mxu0 %v117
    %v1005 = vpop.f32.mrf.mxu0
    %v1006 = vadd.f32 %v253, %v1005
    %v1007 = vpop.f32.mrf.mxu0
    %1008 = vdwg.mxu0
    %1009 = vmatpush.bf16.msra.mxu0 %v662
    %1010 = vmatpush.bf16.msra.mxu0 %v660
    %1011 = vmatpush.bf16.msra.mxu0 %v658
    %1012 = vmatpush.bf16.msra.mxu0 %v656
    %1013 = vmatpush.bf16.msra.mxu0 %v654
    %1014 = vmatpush.bf16.msra.mxu0 %v652
    %1015 = vmatpush.bf16.msra.mxu0 %v650
    %1016 = vmatpush.bf16.msra.mxu0 %v648
    %1017 = vmatmul.bf16.gmra.mxu0 %v118
    %v1018 = vpop.f32.mrf.mxu0
    %v1019 = vadd.f32 %v1006, %v1018
    %v1020 = vpop.f32.mrf.mxu0
    %1021 = vdwg.mxu0
    %1022 = vmatpush.bf16.msra.mxu0 %v678
    %1023 = vmatpush.bf16.msra.mxu0 %v676
    %1024 = vmatpush.bf16.msra.mxu0 %v674
    %1025 = vmatpush.bf16.msra.mxu0 %v672
    %1026 = vmatpush.bf16.msra.mxu0 %v670
    %1027 = vmatpush.bf16.msra.mxu0 %v668
    %1028 = vmatpush.bf16.msra.mxu0 %v666
    %1029 = vmatpush.bf16.msra.mxu0 %v664
    %1030 = vmatmul.bf16.gmra.mxu0 %v119
    %v1031 = vpop.f32.mrf.mxu0
    %v1032 = vadd.f32 %v1019, %v1031
    %v1033 = vpop.f32.mrf.mxu0
    %1034 = vdwg.mxu0
    %1035 = vmatpush.bf16.msra.mxu0 %v694
    %1036 = vmatpush.bf16.msra.mxu0 %v692
    %1037 = vmatpush.bf16.msra.mxu0 %v690
    %1038 = vmatpush.bf16.msra.mxu0 %v688
    %1039 = vmatpush.bf16.msra.mxu0 %v686
    %1040 = vmatpush.bf16.msra.mxu0 %v684
    %1041 = vmatpush.bf16.msra.mxu0 %v682
    %1042 = vmatpush.bf16.msra.mxu0 %v680
    %1043 = vmatmul.bf16.gmra.mxu0 %v120
    %v1044 = vpop.f32.mrf.mxu0
    %v1045 = vadd.f32 %v1032, %v1044
    %v1046 = vpop.f32.mrf.mxu0
    %1047 = vdwg.mxu0
    %1048 = vmatpush.bf16.msra.mxu0 %v710
    %1049 = vmatpush.bf16.msra.mxu0 %v708
    %1050 = vmatpush.bf16.msra.mxu0 %v706
    %1051 = vmatpush.bf16.msra.mxu0 %v704
    %1052 = vmatpush.bf16.msra.mxu0 %v702
    %1053 = vmatpush.bf16.msra.mxu0 %v700
    %1054 = vmatpush.bf16.msra.mxu0 %v698
    %1055 = vmatpush.bf16.msra.mxu0 %v696
    %1056 = vmatmul.bf16.gmra.mxu0 %v121
    %v1057 = vpop.f32.mrf.mxu0
    %v1058 = vadd.f32 %v1045, %v1057
    %v1059 = vpop.f32.mrf.mxu0
    %1060 = vdwg.mxu0
    %1061 = vmatpush.bf16.msra.mxu0 %v726
    %1062 = vmatpush.bf16.msra.mxu0 %v724
    %1063 = vmatpush.bf16.msra.mxu0 %v722
    %1064 = vmatpush.bf16.msra.mxu0 %v720
    %1065 = vmatpush.bf16.msra.mxu0 %v718
    %1066 = vmatpush.bf16.msra.mxu0 %v716
    %1067 = vmatpush.bf16.msra.mxu0 %v714
    %1068 = vmatpush.bf16.msra.mxu0 %v712
    %1069 = vmatmul.bf16.gmra.mxu0 %v122
    %v1070 = vpop.f32.mrf.mxu0
    %v1071 = vadd.f32 %v1058, %v1070
    %v1072 = vpop.f32.mrf.mxu0
    %1073 = vdwg.mxu0
    %1074 = vmatpush.bf16.msra.mxu0 %v742
    %1075 = vmatpush.bf16.msra.mxu0 %v740
    %1076 = vmatpush.bf16.msra.mxu0 %v738
    %1077 = vmatpush.bf16.msra.mxu0 %v736
    %1078 = vmatpush.bf16.msra.mxu0 %v734
    %1079 = vmatpush.bf16.msra.mxu0 %v732
    %1080 = vmatpush.bf16.msra.mxu0 %v730
    %1081 = vmatpush.bf16.msra.mxu0 %v728
    %1082 = vmatmul.bf16.gmra.mxu0 %v123
    %v1083 = vpop.f32.mrf.mxu0
    %v1084 = vadd.f32 %v1071, %v1083
    %v1085 = vpop.f32.mrf.mxu0
    %1086 = vdwg.mxu0
    %1087 = vmatpush.bf16.msra.mxu0 0
    %1088 = vmatpush.bf16.msra.mxu0 %v890
    %1089 = vmatpush.bf16.msra.mxu0 %v754
    %1090 = vmatpush.bf16.msra.mxu0 %v752
    %1091 = vmatpush.bf16.msra.mxu0 %v750
    %1092 = vmatpush.bf16.msra.mxu0 %v748
    %1093 = vmatpush.bf16.msra.mxu0 %v746
    %1094 = vmatpush.bf16.msra.mxu0 %v744
    %1095 = vmatmul.bf16.gmra.mxu0 %v883
    %v1096 = vpop.f32.mrf.mxu0
    %v1097 = vadd.f32 %v1084, %v1096
    %v1098 = vpop.f32.mrf.mxu0
    %1099 = vdwg.mxu0
    %v1100 = vxor.u32 %v993, 2147483648
    %v1101 = vxor.u32 %v1097, 2147483648
    %v1102 = vmul.f32 %v1100, 1.442695
    %v1103 = vpow.pop %v1102
    %v1104 = vmul.f32 %v1101, 1.442695
    %v1105 = vpow.pop %v1104
    %v1106 = vadd.f32 %v1103, 1.0
    %v1107 = vadd.f32 %v1105, 1.0
    %v1108 = vrcp.pop %v1106
    %v1109 = vmul.f32 %v1106, %v1108
    %v1110 = vsub.f32 1.0, %v1109
    %v1111 = vmul.f32 %v1108, %v1110
    %v1112 = vadd.f32 %v1108, %v1111
    %vm1113 = vweird.f32 %v1106
    %vm1114 = vweird.f32 %v1108
    %vm1115 = vmor %vm1113, %vm1114
    %v1116 = vsel %vm1115, %v1108, %v1112
    %v1117 = vand.u32 2147483647, %v1106
    %vm1118 = vcmp.eq.f32.partialorder %v1117, 8.507059e+37
    %v1119 = vand.u32 %v1106, 2147483648
    %v1120 = vor.u32 1.1754944e-38, %v1119
    %v1121 = vsel %vm1118, %v1120, %v1116
    %v1122 = vmul.f32 1.0, %v1121
    %v1123 = vrcp.pop %v1107
    %v1124 = vmul.f32 %v1107, %v1123
    %v1125 = vsub.f32 1.0, %v1124
    %v1126 = vmul.f32 %v1123, %v1125
    %v1127 = vadd.f32 %v1123, %v1126
    %vm1128 = vweird.f32 %v1107
    %vm1129 = vweird.f32 %v1123
    %vm1130 = vmor %vm1128, %vm1129
    %v1131 = vsel %vm1130, %v1123, %v1127
    %v1132 = vand.u32 2147483647, %v1107
    %vm1133 = vcmp.eq.f32.partialorder %v1132, 8.507059e+37
    %v1134 = vand.u32 %v1107, 2147483648
    %v1135 = vor.u32 1.1754944e-38, %v1134
    %v1136 = vsel %vm1133, %v1135, %v1131
    %v1137 = vmul.f32 1.0, %v1136
    %v1138 = vmul.f32 %v993, %v1122
    %v1139 = vmul.f32 %v1097, %v1137
    %v1140 = vpack.c.bf16 %v1138, %v1138
    %v1141 = vpack.c.bf16 %v1139, %v1139
    %v1142 = vld [vmem:[#allocation8] sm:$0xff]
    %v1143 = vld [vmem:[#allocation8 + $0x8] sm:$0xff]
    %v1144 = vld [vmem:[#allocation8 + $0x10] sm:$0xff]
    %v1145 = vld [vmem:[#allocation8 + $0x18] sm:$0xff]
    %v1146 = vld [vmem:[#allocation8 + $0x20] sm:$0xff]
    %v1147 = vld [vmem:[#allocation8 + $0x28] sm:$0xff]
    %v1148 = vld [vmem:[#allocation8 + $0x30] sm:$0xff]
    %v1149 = vld [vmem:[#allocation8 + $0x38] sm:$0xff]
    %v1150 = vld [vmem:[#allocation8 + $0x40] sm:$0xff]
    %v1151 = vld [vmem:[#allocation8 + $0x48] sm:$0xff]
    %v1152 = vld [vmem:[#allocation8 + $0x50] sm:$0xff]
    %v1153 = vld [vmem:[#allocation8 + $0x58] sm:$0xff]
    %v1154 = vld [vmem:[#allocation8 + $0x60] sm:$0xff]
    %v1155 = vld [vmem:[#allocation8 + $0x68] sm:$0xff]
    %v1156 = vld [vmem:[#allocation8 + $0x70] sm:$0xff]
    %v1157 = vld [vmem:[#allocation8 + $0x78] sm:$0xff]
    %v1158 = vld [vmem:[#allocation8 + $0x80] sm:$0xff]
    %v1159 = vld [vmem:[#allocation8 + $0x88] sm:$0xff]
    %v1160 = vld [vmem:[#allocation8 + $0x90] sm:$0xff]
    %v1161 = vld [vmem:[#allocation8 + $0x98] sm:$0xff]
    %v1162 = vld [vmem:[#allocation8 + $0xa0] sm:$0xff]
    %v1163 = vld [vmem:[#allocation8 + $0xa8] sm:$0xff]
    %v1164 = vld [vmem:[#allocation8 + $0xb0] sm:$0xff]
    %v1165 = vld [vmem:[#allocation8 + $0xb8] sm:$0xff]
    %v1166 = vld [vmem:[#allocation8 + $0xc0] sm:$0xff]
    %v1167 = vld [vmem:[#allocation8 + $0xc8] sm:$0xff]
    %v1168 = vld [vmem:[#allocation8 + $0xd0] sm:$0xff]
    %v1169 = vld [vmem:[#allocation8 + $0xd8] sm:$0xff]
    %v1170 = vld [vmem:[#allocation8 + $0xe0] sm:$0xff]
    %v1171 = vld [vmem:[#allocation8 + $0xe8] sm:$0xff]
    %v1172 = vld [vmem:[#allocation8 + $0xf0] sm:$0xff]
    %v1173 = vld [vmem:[#allocation8 + $0xf8] sm:$0xff]
    %v1174 = vld [vmem:[#allocation8 + $0x100] sm:$0xff]
    %v1175 = vld [vmem:[#allocation8 + $0x108] sm:$0xff]
    %v1176 = vld [vmem:[#allocation8 + $0x110] sm:$0xff]
    %v1177 = vld [vmem:[#allocation8 + $0x118] sm:$0xff]
    %v1178 = vld [vmem:[#allocation8 + $0x120] sm:$0xff]
    %v1179 = vld [vmem:[#allocation8 + $0x128] sm:$0xff]
    %v1180 = vld [vmem:[#allocation8 + $0x130] sm:$0xff]
    %v1181 = vld [vmem:[#allocation8 + $0x138] sm:$0xff]
    %v1182 = vld [vmem:[#allocation8 + $0x140] sm:$0xff]
    %v1183 = vld [vmem:[#allocation8 + $0x148] sm:$0xff]
    %v1184 = vld [vmem:[#allocation8 + $0x150] sm:$0xff]
    %v1185 = vld [vmem:[#allocation8 + $0x158] sm:$0xff]
    %v1186 = vld [vmem:[#allocation8 + $0x160] sm:$0xff]
    %v1187 = vld [vmem:[#allocation8 + $0x168] sm:$0xff]
    %v1188 = vld [vmem:[#allocation8 + $0x170] sm:$0xff]
    %v1189 = vld [vmem:[#allocation8 + $0x178] sm:$0xff]
    %v1190 = vld [vmem:[#allocation8 + $0x180] sm:$0xff]
    %v1191 = vld [vmem:[#allocation8 + $0x188] sm:$0xff]
    %v1192 = vld [vmem:[#allocation8 + $0x190] sm:$0xff]
    %v1193 = vld [vmem:[#allocation8 + $0x198] sm:$0xff]
    %v1194 = vld [vmem:[#allocation8 + $0x1a0] sm:$0xff]
    %v1195 = vld [vmem:[#allocation8 + $0x1a8] sm:$0xff]
    %v1196 = vld [vmem:[#allocation8 + $0x1b0] sm:$0xff]
    %v1197 = vld [vmem:[#allocation8 + $0x1b8] sm:$0xff]
    %v1198 = vld [vmem:[#allocation8 + $0x1c0] sm:$0xff]
    %v1199 = vld [vmem:[#allocation8 + $0x1c8] sm:$0xff]
    %v1200 = vld [vmem:[#allocation8 + $0x1d0] sm:$0xff]
    %v1201 = vld [vmem:[#allocation8 + $0x1d8] sm:$0xff]
    %v1202 = vld [vmem:[#allocation8 + $0x1e0] sm:$0xff]
    %v1203 = vld [vmem:[#allocation8 + $0x1e8] sm:$0xff]
    %v1204 = vld [vmem:[#allocation8 + $0x1f0] sm:$0xff]
    %v1205 = vld [vmem:[#allocation8 + $0x1f8] sm:$0xff]
    %v1206 = vld [vmem:[#allocation8 + $0x200] sm:$0xff]
    %v1207 = vld [vmem:[#allocation8 + $0x208] sm:$0xff]
    %v1208 = vld [vmem:[#allocation8 + $0x210] sm:$0xff]
    %v1209 = vld [vmem:[#allocation8 + $0x218] sm:$0xff]
    %v1210 = vld [vmem:[#allocation8 + $0x220] sm:$0xff]
    %v1211 = vld [vmem:[#allocation8 + $0x228] sm:$0xff]
    %v1212 = vld [vmem:[#allocation8 + $0x230] sm:$0xff]
    %v1213 = vld [vmem:[#allocation8 + $0x238] sm:$0xff]
    %v1214 = vld [vmem:[#allocation8 + $0x240] sm:$0xff]
    %v1215 = vld [vmem:[#allocation8 + $0x248] sm:$0xff]
    %v1216 = vld [vmem:[#allocation8 + $0x250] sm:$0xff]
    %v1217 = vld [vmem:[#allocation8 + $0x258] sm:$0xff]
    %v1218 = vld [vmem:[#allocation8 + $0x260] sm:$0xff]
    %v1219 = vld [vmem:[#allocation8 + $0x268] sm:$0xff]
    %v1220 = vld [vmem:[#allocation8 + $0x270] sm:$0xff]
    %v1221 = vld [vmem:[#allocation8 + $0x278] sm:$0xff]
    %v1222 = vld [vmem:[#allocation8 + $0x280] sm:$0xff]
    %v1223 = vld [vmem:[#allocation8 + $0x288] sm:$0xff]
    %v1224 = vld [vmem:[#allocation8 + $0x290] sm:$0xff]
    %v1225 = vld [vmem:[#allocation8 + $0x298] sm:$0xff]
    %v1226 = vld [vmem:[#allocation8 + $0x2a0] sm:$0xff]
    %v1227 = vld [vmem:[#allocation8 + $0x2a8] sm:$0xff]
    %v1228 = vld [vmem:[#allocation8 + $0x2b0] sm:$0xff]
    %v1229 = vld [vmem:[#allocation8 + $0x2b8] sm:$0xff]
    %v1230 = vld [vmem:[#allocation8 + $0x2c0] sm:$0xff]
    %v1231 = vld [vmem:[#allocation8 + $0x2c8] sm:$0xff]
    %v1232 = vld [vmem:[#allocation8 + $0x2d0] sm:$0xff]
    %v1233 = vld [vmem:[#allocation8 + $0x2d8] sm:$0xff]
    %v1234 = vld [vmem:[#allocation8 + $0x2e0] sm:$0xff]
    %v1235 = vld [vmem:[#allocation8 + $0x2e8] sm:$0xff]
    %v1236 = vld [vmem:[#allocation8 + $0x2f0] sm:$0xff]
    %v1237 = vld [vmem:[#allocation8 + $0x2f8] sm:$0xff]
    %v1238 = vld [vmem:[#allocation8 + $0x300] sm:$0xff]
    %v1239 = vld [vmem:[#allocation8 + $0x308] sm:$0xff]
    %v1240 = vld [vmem:[#allocation8 + $0x310] sm:$0xff]
    %v1241 = vld [vmem:[#allocation8 + $0x318] sm:$0xff]
    %v1242 = vld [vmem:[#allocation8 + $0x320] sm:$0xff]
    %v1243 = vld [vmem:[#allocation8 + $0x328] sm:$0xff]
    %v1244 = vld [vmem:[#allocation8 + $0x330] sm:$0xff]
    %v1245 = vld [vmem:[#allocation8 + $0x338] sm:$0xff]
    %v1246 = vld [vmem:[#allocation8 + $0x340] sm:$0xff]
    %v1247 = vld [vmem:[#allocation8 + $0x348] sm:$0xff]
    %v1248 = vld [vmem:[#allocation8 + $0x350] sm:$0xff]
    %v1249 = vld [vmem:[#allocation8 + $0x358] sm:$0xff]
    %v1250 = vld [vmem:[#allocation8 + $0x360] sm:$0xff]
    %v1251 = vld [vmem:[#allocation8 + $0x368] sm:$0xff]
    %v1252 = vld [vmem:[#allocation8 + $0x370] sm:$0xff]
    %v1253 = vld [vmem:[#allocation8 + $0x378] sm:$0xff]
    %v1254 = vld [vmem:[#allocation8 + $0x380] sm:$0xff]
    %v1255 = vld [vmem:[#allocation8 + $0x388] sm:$0xff]
    %v1256 = vld [vmem:[#allocation8 + $0x390] sm:$0xff]
    %v1257 = vld [vmem:[#allocation8 + $0x398] sm:$0xff]
    %v1258 = vld [vmem:[#allocation8 + $0x3a0] sm:$0xff]
    %v1259 = vld [vmem:[#allocation8 + $0x3a8] sm:$0xff]
    %v1260 = vld [vmem:[#allocation8 + $0x3b0] sm:$0xff]
    %v1261 = vld [vmem:[#allocation8 + $0x3b8] sm:$0xff]
    %v1262 = vld [vmem:[#allocation8 + $0x3c0] sm:$0xff]
    %v1263 = vld [vmem:[#allocation8 + $0x3c8] sm:$0xff]
    %v1264 = vld [vmem:[#allocation8 + $0x3d0] sm:$0xff]
    %v1265 = vld [vmem:[#allocation8 + $0x3d8] sm:$0xff]
    %v1266 = vld [vmem:[#allocation8 + $0x3e0] sm:$0xff]
    %v1267 = vld [vmem:[#allocation8 + $0x3e8] sm:$0xff]
    %v1268 = vld [vmem:[#allocation8 + $0x3f0] sm:$0xff]
    %v1269 = vld [vmem:[#allocation8 + $0x3f8] sm:$0xff]
    %v1270 = vld [vmem:[#allocation10] sm:$0xff]
    %v1272 = vperm.slane %v1270, 0
    %v1273 = vperm.slane %v1270, 1
    %v1274 = vperm.slane %v1270, 2
    %v1275 = vperm.slane %v1270, 3
    %v1276 = vperm.slane %v1270, 4
    %v1277 = vperm.slane %v1270, 5
    %v1278 = vperm.slane %v1270, 6
    %v1279 = vperm.slane %v1270, 7
    %v1416 = vunpack.c.l.b16 %v1142
    %v1417 = vunpack.c.h.b16 %v1142
    %v1418 = vunpack.c.l.b16 %v1143
    %v1419 = vunpack.c.h.b16 %v1143
    %v1420 = vunpack.c.l.b16 %v1144
    %v1421 = vunpack.c.h.b16 %v1144
    %v1422 = vunpack.c.l.b16 %v1145
    %v1423 = vunpack.c.h.b16 %v1145
    %v1424 = vunpack.c.l.b16 %v1146
    %v1425 = vunpack.c.h.b16 %v1146
    %v1426 = vunpack.c.l.b16 %v1147
    %v1427 = vunpack.c.h.b16 %v1147
    %v1428 = vunpack.c.l.b16 %v1148
    %v1429 = vunpack.c.h.b16 %v1148
    %v1430 = vunpack.c.l.b16 %v1149
    %v1431 = vunpack.c.h.b16 %v1149
    %v1432 = vunpack.c.l.b16 %v1150
    %v1433 = vunpack.c.h.b16 %v1150
    %v1434 = vunpack.c.l.b16 %v1151
    %v1435 = vunpack.c.h.b16 %v1151
    %v1436 = vunpack.c.l.b16 %v1152
    %v1437 = vunpack.c.h.b16 %v1152
    %v1438 = vunpack.c.l.b16 %v1153
    %v1439 = vunpack.c.h.b16 %v1153
    %v1440 = vunpack.c.l.b16 %v1154
    %v1441 = vunpack.c.h.b16 %v1154
    %v1442 = vunpack.c.l.b16 %v1155
    %v1443 = vunpack.c.h.b16 %v1155
    %v1444 = vunpack.c.l.b16 %v1156
    %v1445 = vunpack.c.h.b16 %v1156
    %v1446 = vunpack.c.l.b16 %v1157
    %v1447 = vunpack.c.h.b16 %v1157
    %v1448 = vunpack.c.l.b16 %v1158
    %v1449 = vunpack.c.h.b16 %v1158
    %v1450 = vunpack.c.l.b16 %v1159
    %v1451 = vunpack.c.h.b16 %v1159
    %v1452 = vunpack.c.l.b16 %v1160
    %v1453 = vunpack.c.h.b16 %v1160
    %v1454 = vunpack.c.l.b16 %v1161
    %v1455 = vunpack.c.h.b16 %v1161
    %v1456 = vunpack.c.l.b16 %v1162
    %v1457 = vunpack.c.h.b16 %v1162
    %v1458 = vunpack.c.l.b16 %v1163
    %v1459 = vunpack.c.h.b16 %v1163
    %v1460 = vunpack.c.l.b16 %v1164
    %v1461 = vunpack.c.h.b16 %v1164
    %v1462 = vunpack.c.l.b16 %v1165
    %v1463 = vunpack.c.h.b16 %v1165
    %v1464 = vunpack.c.l.b16 %v1166
    %v1465 = vunpack.c.h.b16 %v1166
    %v1466 = vunpack.c.l.b16 %v1167
    %v1467 = vunpack.c.h.b16 %v1167
    %v1468 = vunpack.c.l.b16 %v1168
    %v1469 = vunpack.c.h.b16 %v1168
    %v1470 = vunpack.c.l.b16 %v1169
    %v1471 = vunpack.c.h.b16 %v1169
    %v1472 = vunpack.c.l.b16 %v1170
    %v1473 = vunpack.c.h.b16 %v1170
    %v1474 = vunpack.c.l.b16 %v1171
    %v1475 = vunpack.c.h.b16 %v1171
    %v1476 = vunpack.c.l.b16 %v1172
    %v1477 = vunpack.c.h.b16 %v1172
    %v1478 = vunpack.c.l.b16 %v1173
    %v1479 = vunpack.c.h.b16 %v1173
    %v1480 = vunpack.c.l.b16 %v1174
    %v1481 = vunpack.c.h.b16 %v1174
    %v1482 = vunpack.c.l.b16 %v1175
    %v1483 = vunpack.c.h.b16 %v1175
    %v1484 = vunpack.c.l.b16 %v1176
    %v1485 = vunpack.c.h.b16 %v1176
    %v1486 = vunpack.c.l.b16 %v1177
    %v1487 = vunpack.c.h.b16 %v1177
    %v1488 = vunpack.c.l.b16 %v1178
    %v1489 = vunpack.c.h.b16 %v1178
    %v1490 = vunpack.c.l.b16 %v1179
    %v1491 = vunpack.c.h.b16 %v1179
    %v1492 = vunpack.c.l.b16 %v1180
    %v1493 = vunpack.c.h.b16 %v1180
    %v1494 = vunpack.c.l.b16 %v1181
    %v1495 = vunpack.c.h.b16 %v1181
    %v1496 = vunpack.c.l.b16 %v1182
    %v1497 = vunpack.c.h.b16 %v1182
    %v1498 = vunpack.c.l.b16 %v1183
    %v1499 = vunpack.c.h.b16 %v1183
    %v1500 = vunpack.c.l.b16 %v1184
    %v1501 = vunpack.c.h.b16 %v1184
    %v1502 = vunpack.c.l.b16 %v1185
    %v1503 = vunpack.c.h.b16 %v1185
    %v1504 = vunpack.c.l.b16 %v1186
    %v1505 = vunpack.c.h.b16 %v1186
    %v1506 = vunpack.c.l.b16 %v1187
    %v1507 = vunpack.c.h.b16 %v1187
    %v1508 = vunpack.c.l.b16 %v1188
    %v1509 = vunpack.c.h.b16 %v1188
    %v1510 = vunpack.c.l.b16 %v1189
    %v1511 = vunpack.c.h.b16 %v1189
    %v1512 = vunpack.c.l.b16 %v1190
    %v1513 = vunpack.c.h.b16 %v1190
    %v1514 = vunpack.c.l.b16 %v1191
    %v1515 = vunpack.c.h.b16 %v1191
    %v1516 = vunpack.c.l.b16 %v1192
    %v1517 = vunpack.c.h.b16 %v1192
    %v1518 = vunpack.c.l.b16 %v1193
    %v1519 = vunpack.c.h.b16 %v1193
    %v1520 = vunpack.c.l.b16 %v1194
    %v1521 = vunpack.c.h.b16 %v1194
    %v1522 = vunpack.c.l.b16 %v1195
    %v1523 = vunpack.c.h.b16 %v1195
    %v1524 = vunpack.c.l.b16 %v1196
    %v1525 = vunpack.c.h.b16 %v1196
    %v1526 = vunpack.c.l.b16 %v1197
    %v1527 = vunpack.c.h.b16 %v1197
    %v1528 = vunpack.c.l.b16 %v1198
    %v1529 = vunpack.c.h.b16 %v1198
    %v1530 = vunpack.c.l.b16 %v1199
    %v1531 = vunpack.c.h.b16 %v1199
    %v1532 = vunpack.c.l.b16 %v1200
    %v1533 = vunpack.c.h.b16 %v1200
    %v1534 = vunpack.c.l.b16 %v1201
    %v1535 = vunpack.c.h.b16 %v1201
    %v1536 = vunpack.c.l.b16 %v1202
    %v1537 = vunpack.c.h.b16 %v1202
    %v1538 = vunpack.c.l.b16 %v1203
    %v1539 = vunpack.c.h.b16 %v1203
    %v1540 = vunpack.c.l.b16 %v1204
    %v1541 = vunpack.c.h.b16 %v1204
    %v1542 = vunpack.c.l.b16 %v1205
    %v1543 = vunpack.c.h.b16 %v1205
    %v1544 = vunpack.c.l.b16 %v1206
    %v1545 = vunpack.c.h.b16 %v1206
    %v1546 = vunpack.c.l.b16 %v1207
    %v1547 = vunpack.c.h.b16 %v1207
    %v1548 = vunpack.c.l.b16 %v1208
    %v1549 = vunpack.c.h.b16 %v1208
    %v1550 = vunpack.c.l.b16 %v1209
    %v1551 = vunpack.c.h.b16 %v1209
    %v1552 = vunpack.c.l.b16 %v1210
    %v1553 = vunpack.c.h.b16 %v1210
    %v1554 = vunpack.c.l.b16 %v1211
    %v1555 = vunpack.c.h.b16 %v1211
    %v1556 = vunpack.c.l.b16 %v1212
    %v1557 = vunpack.c.h.b16 %v1212
    %v1558 = vunpack.c.l.b16 %v1213
    %v1559 = vunpack.c.h.b16 %v1213
    %v1560 = vunpack.c.l.b16 %v1214
    %v1561 = vunpack.c.h.b16 %v1214
    %v1562 = vunpack.c.l.b16 %v1215
    %v1563 = vunpack.c.h.b16 %v1215
    %v1564 = vunpack.c.l.b16 %v1216
    %v1565 = vunpack.c.h.b16 %v1216
    %v1566 = vunpack.c.l.b16 %v1217
    %v1567 = vunpack.c.h.b16 %v1217
    %v1568 = vunpack.c.l.b16 %v1218
    %v1569 = vunpack.c.h.b16 %v1218
    %v1570 = vunpack.c.l.b16 %v1219
    %v1571 = vunpack.c.h.b16 %v1219
    %v1572 = vunpack.c.l.b16 %v1220
    %v1573 = vunpack.c.h.b16 %v1220
    %v1574 = vunpack.c.l.b16 %v1221
    %v1575 = vunpack.c.h.b16 %v1221
    %v1576 = vunpack.c.l.b16 %v1222
    %v1577 = vunpack.c.h.b16 %v1222
    %v1578 = vunpack.c.l.b16 %v1223
    %v1579 = vunpack.c.h.b16 %v1223
    %v1580 = vunpack.c.l.b16 %v1224
    %v1581 = vunpack.c.h.b16 %v1224
    %v1582 = vunpack.c.l.b16 %v1225
    %v1583 = vunpack.c.h.b16 %v1225
    %v1584 = vunpack.c.l.b16 %v1226
    %v1585 = vunpack.c.h.b16 %v1226
    %v1586 = vunpack.c.l.b16 %v1227
    %v1587 = vunpack.c.h.b16 %v1227
    %v1588 = vunpack.c.l.b16 %v1228
    %v1589 = vunpack.c.h.b16 %v1228
    %v1590 = vunpack.c.l.b16 %v1229
    %v1591 = vunpack.c.h.b16 %v1229
    %v1592 = vunpack.c.l.b16 %v1230
    %v1593 = vunpack.c.h.b16 %v1230
    %v1594 = vunpack.c.l.b16 %v1231
    %v1595 = vunpack.c.h.b16 %v1231
    %v1596 = vunpack.c.l.b16 %v1232
    %v1597 = vunpack.c.h.b16 %v1232
    %v1598 = vunpack.c.l.b16 %v1233
    %v1599 = vunpack.c.h.b16 %v1233
    %v1600 = vunpack.c.l.b16 %v1234
    %v1601 = vunpack.c.h.b16 %v1234
    %v1602 = vunpack.c.l.b16 %v1235
    %v1603 = vunpack.c.h.b16 %v1235
    %v1604 = vunpack.c.l.b16 %v1236
    %v1605 = vunpack.c.h.b16 %v1236
    %v1606 = vunpack.c.l.b16 %v1237
    %v1607 = vunpack.c.h.b16 %v1237
    %v1608 = vunpack.c.l.b16 %v1238
    %v1609 = vunpack.c.h.b16 %v1238
    %v1610 = vunpack.c.l.b16 %v1239
    %v1611 = vunpack.c.h.b16 %v1239
    %v1612 = vunpack.c.l.b16 %v1240
    %v1613 = vunpack.c.h.b16 %v1240
    %v1614 = vunpack.c.l.b16 %v1241
    %v1615 = vunpack.c.h.b16 %v1241
    %v1616 = vunpack.c.l.b16 %v1242
    %v1617 = vunpack.c.h.b16 %v1242
    %v1618 = vunpack.c.l.b16 %v1243
    %v1619 = vunpack.c.h.b16 %v1243
    %v1620 = vunpack.c.l.b16 %v1244
    %v1621 = vunpack.c.h.b16 %v1244
    %v1622 = vunpack.c.l.b16 %v1245
    %v1623 = vunpack.c.h.b16 %v1245
    %v1624 = vunpack.c.l.b16 %v1246
    %v1625 = vunpack.c.h.b16 %v1246
    %v1626 = vunpack.c.l.b16 %v1247
    %v1627 = vunpack.c.h.b16 %v1247
    %v1628 = vunpack.c.l.b16 %v1248
    %v1629 = vunpack.c.h.b16 %v1248
    %v1630 = vunpack.c.l.b16 %v1249
    %v1631 = vunpack.c.h.b16 %v1249
    %v1632 = vunpack.c.l.b16 %v1250
    %v1633 = vunpack.c.h.b16 %v1250
    %v1634 = vunpack.c.l.b16 %v1251
    %v1635 = vunpack.c.h.b16 %v1251
    %v1636 = vunpack.c.l.b16 %v1252
    %v1637 = vunpack.c.h.b16 %v1252
    %v1638 = vunpack.c.l.b16 %v1253
    %v1639 = vunpack.c.h.b16 %v1253
    %v1640 = vunpack.c.l.b16 %v1254
    %v1641 = vunpack.c.h.b16 %v1254
    %v1642 = vunpack.c.l.b16 %v1255
    %v1643 = vunpack.c.h.b16 %v1255
    %v1644 = vunpack.c.l.b16 %v1256
    %v1645 = vunpack.c.h.b16 %v1256
    %v1646 = vunpack.c.l.b16 %v1257
    %v1647 = vunpack.c.h.b16 %v1257
    %v1648 = vunpack.c.l.b16 %v1258
    %v1649 = vunpack.c.h.b16 %v1258
    %v1650 = vunpack.c.l.b16 %v1259
    %v1651 = vunpack.c.h.b16 %v1259
    %v1652 = vunpack.c.l.b16 %v1260
    %v1653 = vunpack.c.h.b16 %v1260
    %v1654 = vunpack.c.l.b16 %v1261
    %v1655 = vunpack.c.h.b16 %v1261
    %v1656 = vunpack.c.l.b16 %v1262
    %v1657 = vunpack.c.h.b16 %v1262
    %v1658 = vunpack.c.l.b16 %v1263
    %v1659 = vunpack.c.h.b16 %v1263
    %v1660 = vunpack.c.l.b16 %v1264
    %v1661 = vunpack.c.h.b16 %v1264
    %v1662 = vunpack.c.l.b16 %v1265
    %v1663 = vunpack.c.h.b16 %v1265
    %v1664 = vunpack.c.l.b16 %v1266
    %v1665 = vunpack.c.h.b16 %v1266
    %v1666 = vunpack.c.l.b16 %v1267
    %v1667 = vunpack.c.h.b16 %v1267
    %v1668 = vunpack.c.l.b16 %v1268
    %v1669 = vunpack.c.h.b16 %v1268
    %v1670 = vunpack.c.l.b16 %v1269
    %v1671 = vunpack.c.h.b16 %v1269
    %v1672 = vpack.c.b16 %v1424, %v1416
    %v1673 = vpack.c.b16 %v1425, %v1417
    %v1674 = vpack.c.b16 %v1426, %v1418
    %v1675 = vpack.c.b16 %v1427, %v1419
    %v1676 = vpack.c.b16 %v1428, %v1420
    %v1677 = vpack.c.b16 %v1429, %v1421
    %v1678 = vpack.c.b16 %v1430, %v1422
    %v1679 = vpack.c.b16 %v1431, %v1423
    %v1680 = vpack.c.b16 %v1440, %v1432
    %v1681 = vpack.c.b16 %v1441, %v1433
    %v1682 = vpack.c.b16 %v1442, %v1434
    %v1683 = vpack.c.b16 %v1443, %v1435
    %v1684 = vpack.c.b16 %v1444, %v1436
    %v1685 = vpack.c.b16 %v1445, %v1437
    %v1686 = vpack.c.b16 %v1446, %v1438
    %v1687 = vpack.c.b16 %v1447, %v1439
    %v1688 = vpack.c.b16 %v1456, %v1448
    %v1689 = vpack.c.b16 %v1457, %v1449
    %v1690 = vpack.c.b16 %v1458, %v1450
    %v1691 = vpack.c.b16 %v1459, %v1451
    %v1692 = vpack.c.b16 %v1460, %v1452
    %v1693 = vpack.c.b16 %v1461, %v1453
    %v1694 = vpack.c.b16 %v1462, %v1454
    %v1695 = vpack.c.b16 %v1463, %v1455
    %v1696 = vpack.c.b16 %v1472, %v1464
    %v1697 = vpack.c.b16 %v1473, %v1465
    %v1698 = vpack.c.b16 %v1474, %v1466
    %v1699 = vpack.c.b16 %v1475, %v1467
    %v1700 = vpack.c.b16 %v1476, %v1468
    %v1701 = vpack.c.b16 %v1477, %v1469
    %v1702 = vpack.c.b16 %v1478, %v1470
    %v1703 = vpack.c.b16 %v1479, %v1471
    %v1704 = vpack.c.b16 %v1488, %v1480
    %v1705 = vpack.c.b16 %v1489, %v1481
    %v1706 = vpack.c.b16 %v1490, %v1482
    %v1707 = vpack.c.b16 %v1491, %v1483
    %v1708 = vpack.c.b16 %v1492, %v1484
    %v1709 = vpack.c.b16 %v1493, %v1485
    %v1710 = vpack.c.b16 %v1494, %v1486
    %v1711 = vpack.c.b16 %v1495, %v1487
    %v1712 = vpack.c.b16 %v1504, %v1496
    %v1713 = vpack.c.b16 %v1505, %v1497
    %v1714 = vpack.c.b16 %v1506, %v1498
    %v1715 = vpack.c.b16 %v1507, %v1499
    %v1716 = vpack.c.b16 %v1508, %v1500
    %v1717 = vpack.c.b16 %v1509, %v1501
    %v1718 = vpack.c.b16 %v1510, %v1502
    %v1719 = vpack.c.b16 %v1511, %v1503
    %v1720 = vpack.c.b16 %v1520, %v1512
    %v1721 = vpack.c.b16 %v1521, %v1513
    %v1722 = vpack.c.b16 %v1522, %v1514
    %v1723 = vpack.c.b16 %v1523, %v1515
    %v1724 = vpack.c.b16 %v1524, %v1516
    %v1725 = vpack.c.b16 %v1525, %v1517
    %v1726 = vpack.c.b16 %v1526, %v1518
    %v1727 = vpack.c.b16 %v1527, %v1519
    %v1728 = vpack.c.b16 %v1536, %v1528
    %v1729 = vpack.c.b16 %v1537, %v1529
    %v1730 = vpack.c.b16 %v1538, %v1530
    %v1731 = vpack.c.b16 %v1539, %v1531
    %v1732 = vpack.c.b16 %v1540, %v1532
    %v1733 = vpack.c.b16 %v1541, %v1533
    %v1734 = vpack.c.b16 %v1542, %v1534
    %v1735 = vpack.c.b16 %v1543, %v1535
    %v1736 = vpack.c.b16 %v1552, %v1544
    %v1737 = vpack.c.b16 %v1553, %v1545
    %v1738 = vpack.c.b16 %v1554, %v1546
    %v1739 = vpack.c.b16 %v1555, %v1547
    %v1740 = vpack.c.b16 %v1556, %v1548
    %v1741 = vpack.c.b16 %v1557, %v1549
    %v1742 = vpack.c.b16 %v1558, %v1550
    %v1743 = vpack.c.b16 %v1559, %v1551
    %v1744 = vpack.c.b16 %v1568, %v1560
    %v1745 = vpack.c.b16 %v1569, %v1561
    %v1746 = vpack.c.b16 %v1570, %v1562
    %v1747 = vpack.c.b16 %v1571, %v1563
    %v1748 = vpack.c.b16 %v1572, %v1564
    %v1749 = vpack.c.b16 %v1573, %v1565
    %v1750 = vpack.c.b16 %v1574, %v1566
    %v1751 = vpack.c.b16 %v1575, %v1567
    %v1752 = vpack.c.b16 %v1584, %v1576
    %v1753 = vpack.c.b16 %v1585, %v1577
    %v1754 = vpack.c.b16 %v1586, %v1578
    %v1755 = vpack.c.b16 %v1587, %v1579
    %v1756 = vpack.c.b16 %v1588, %v1580
    %v1757 = vpack.c.b16 %v1589, %v1581
    %v1758 = vpack.c.b16 %v1590, %v1582
    %v1759 = vpack.c.b16 %v1591, %v1583
    %v1760 = vpack.c.b16 %v1600, %v1592
    %v1761 = vpack.c.b16 %v1601, %v1593
    %v1762 = vpack.c.b16 %v1602, %v1594
    %v1763 = vpack.c.b16 %v1603, %v1595
    %v1764 = vpack.c.b16 %v1604, %v1596
    %v1765 = vpack.c.b16 %v1605, %v1597
    %v1766 = vpack.c.b16 %v1606, %v1598
    %v1767 = vpack.c.b16 %v1607, %v1599
    %v1768 = vpack.c.b16 %v1616, %v1608
    %v1769 = vpack.c.b16 %v1617, %v1609
    %v1770 = vpack.c.b16 %v1618, %v1610
    %v1771 = vpack.c.b16 %v1619, %v1611
    %v1772 = vpack.c.b16 %v1620, %v1612
    %v1773 = vpack.c.b16 %v1621, %v1613
    %v1774 = vpack.c.b16 %v1622, %v1614
    %v1775 = vpack.c.b16 %v1623, %v1615
    %v1776 = vpack.c.b16 %v1632, %v1624
    %v1777 = vpack.c.b16 %v1633, %v1625
    %v1778 = vpack.c.b16 %v1634, %v1626
    %v1779 = vpack.c.b16 %v1635, %v1627
    %v1780 = vpack.c.b16 %v1636, %v1628
    %v1781 = vpack.c.b16 %v1637, %v1629
    %v1782 = vpack.c.b16 %v1638, %v1630
    %v1783 = vpack.c.b16 %v1639, %v1631
    %v1784 = vpack.c.b16 %v1648, %v1640
    %v1785 = vpack.c.b16 %v1649, %v1641
    %v1786 = vpack.c.b16 %v1650, %v1642
    %v1787 = vpack.c.b16 %v1651, %v1643
    %v1788 = vpack.c.b16 %v1652, %v1644
    %v1789 = vpack.c.b16 %v1653, %v1645
    %v1790 = vpack.c.b16 %v1654, %v1646
    %v1791 = vpack.c.b16 %v1655, %v1647
    %v1792 = vpack.c.b16 %v1664, %v1656
    %v1793 = vpack.c.b16 %v1665, %v1657
    %v1794 = vpack.c.b16 %v1666, %v1658
    %v1795 = vpack.c.b16 %v1667, %v1659
    %v1796 = vpack.c.b16 %v1668, %v1660
    %v1797 = vpack.c.b16 %v1669, %v1661
    %v1798 = vpack.c.b16 %v1670, %v1662
    %v1799 = vpack.c.b16 %v1671, %v1663
    %1928 = vmatpush.bf16.msra.mxu0 %v1728
    %1929 = vmatpush.bf16.msra.mxu0 %v1720
    %1930 = vmatpush.bf16.msra.mxu0 %v1712
    %1931 = vmatpush.bf16.msra.mxu0 %v1704
    %1932 = vmatpush.bf16.msra.mxu0 %v1696
    %1933 = vmatpush.bf16.msra.mxu0 %v1688
    %1934 = vmatpush.bf16.msra.mxu0 %v1680
    %1935 = vmatpush.bf16.msra.mxu0 %v1672
    %1936 = vmatmul.bf16.gmra.mxu0 %v1140
    %v1937 = vpop.f32.mrf.mxu0
    %v1938 = vadd.f32 %v1272, %v1937
    %v1939 = vpop.f32.mrf.mxu0
    %1940 = vdwg.mxu0
    %1941 = vmatpush.bf16.msra.mxu0 %v1792
    %1942 = vmatpush.bf16.msra.mxu0 %v1784
    %1943 = vmatpush.bf16.msra.mxu0 %v1776
    %1944 = vmatpush.bf16.msra.mxu0 %v1768
    %1945 = vmatpush.bf16.msra.mxu0 %v1760
    %1946 = vmatpush.bf16.msra.mxu0 %v1752
    %1947 = vmatpush.bf16.msra.mxu0 %v1744
    %1948 = vmatpush.bf16.msra.mxu0 %v1736
    %1949 = vmatmul.bf16.gmra.mxu0 %v1141
    %v1950 = vpop.f32.mrf.mxu0
    %v1951 = vadd.f32 %v1938, %v1950
    %v1952 = vpop.f32.mrf.mxu0
    %1953 = vdwg.mxu0
    %1954 = vmatpush.bf16.msra.mxu0 %v1729
    %1955 = vmatpush.bf16.msra.mxu0 %v1721
    %1956 = vmatpush.bf16.msra.mxu0 %v1713
    %1957 = vmatpush.bf16.msra.mxu0 %v1705
    %1958 = vmatpush.bf16.msra.mxu0 %v1697
    %1959 = vmatpush.bf16.msra.mxu0 %v1689
    %1960 = vmatpush.bf16.msra.mxu0 %v1681
    %1961 = vmatpush.bf16.msra.mxu0 %v1673
    %1962 = vmatmul.bf16.gmra.mxu0 %v1140
    %v1963 = vpop.f32.mrf.mxu0
    %v1964 = vadd.f32 %v1273, %v1963
    %v1965 = vpop.f32.mrf.mxu0
    %1966 = vdwg.mxu0
    %1967 = vmatpush.bf16.msra.mxu0 %v1793
    %1968 = vmatpush.bf16.msra.mxu0 %v1785
    %1969 = vmatpush.bf16.msra.mxu0 %v1777
    %1970 = vmatpush.bf16.msra.mxu0 %v1769
    %1971 = vmatpush.bf16.msra.mxu0 %v1761
    %1972 = vmatpush.bf16.msra.mxu0 %v1753
    %1973 = vmatpush.bf16.msra.mxu0 %v1745
    %1974 = vmatpush.bf16.msra.mxu0 %v1737
    %1975 = vmatmul.bf16.gmra.mxu0 %v1141
    %v1976 = vpop.f32.mrf.mxu0
    %v1977 = vadd.f32 %v1964, %v1976
    %v1978 = vpop.f32.mrf.mxu0
    %1979 = vdwg.mxu0
    %1980 = vmatpush.bf16.msra.mxu0 %v1730
    %1981 = vmatpush.bf16.msra.mxu0 %v1722
    %1982 = vmatpush.bf16.msra.mxu0 %v1714
    %1983 = vmatpush.bf16.msra.mxu0 %v1706
    %1984 = vmatpush.bf16.msra.mxu0 %v1698
    %1985 = vmatpush.bf16.msra.mxu0 %v1690
    %1986 = vmatpush.bf16.msra.mxu0 %v1682
    %1987 = vmatpush.bf16.msra.mxu0 %v1674
    %1988 = vmatmul.bf16.gmra.mxu0 %v1140
    %v1989 = vpop.f32.mrf.mxu0
    %v1990 = vadd.f32 %v1274, %v1989
    %v1991 = vpop.f32.mrf.mxu0
    %1992 = vdwg.mxu0
    %1993 = vmatpush.bf16.msra.mxu0 %v1794
    %1994 = vmatpush.bf16.msra.mxu0 %v1786
    %1995 = vmatpush.bf16.msra.mxu0 %v1778
    %1996 = vmatpush.bf16.msra.mxu0 %v1770
    %1997 = vmatpush.bf16.msra.mxu0 %v1762
    %1998 = vmatpush.bf16.msra.mxu0 %v1754
    %1999 = vmatpush.bf16.msra.mxu0 %v1746
    %2000 = vmatpush.bf16.msra.mxu0 %v1738
    %2001 = vmatmul.bf16.gmra.mxu0 %v1141
    %v2002 = vpop.f32.mrf.mxu0
    %v2003 = vadd.f32 %v1990, %v2002
    %v2004 = vpop.f32.mrf.mxu0
    %2005 = vdwg.mxu0
    %2006 = vmatpush.bf16.msra.mxu0 %v1731
    %2007 = vmatpush.bf16.msra.mxu0 %v1723
    %2008 = vmatpush.bf16.msra.mxu0 %v1715
    %2009 = vmatpush.bf16.msra.mxu0 %v1707
    %2010 = vmatpush.bf16.msra.mxu0 %v1699
    %2011 = vmatpush.bf16.msra.mxu0 %v1691
    %2012 = vmatpush.bf16.msra.mxu0 %v1683
    %2013 = vmatpush.bf16.msra.mxu0 %v1675
    %2014 = vmatmul.bf16.gmra.mxu0 %v1140
    %v2015 = vpop.f32.mrf.mxu0
    %v2016 = vadd.f32 %v1275, %v2015
    %v2017 = vpop.f32.mrf.mxu0
    %2018 = vdwg.mxu0
    %2019 = vmatpush.bf16.msra.mxu0 %v1795
    %2020 = vmatpush.bf16.msra.mxu0 %v1787
    %2021 = vmatpush.bf16.msra.mxu0 %v1779
    %2022 = vmatpush.bf16.msra.mxu0 %v1771
    %2023 = vmatpush.bf16.msra.mxu0 %v1763
    %2024 = vmatpush.bf16.msra.mxu0 %v1755
    %2025 = vmatpush.bf16.msra.mxu0 %v1747
    %2026 = vmatpush.bf16.msra.mxu0 %v1739
    %2027 = vmatmul.bf16.gmra.mxu0 %v1141
    %v2028 = vpop.f32.mrf.mxu0
    %v2029 = vadd.f32 %v2016, %v2028
    %v2030 = vpop.f32.mrf.mxu0
    %2031 = vdwg.mxu0
    %2032 = vmatpush.bf16.msra.mxu0 %v1732
    %2033 = vmatpush.bf16.msra.mxu0 %v1724
    %2034 = vmatpush.bf16.msra.mxu0 %v1716
    %2035 = vmatpush.bf16.msra.mxu0 %v1708
    %2036 = vmatpush.bf16.msra.mxu0 %v1700
    %2037 = vmatpush.bf16.msra.mxu0 %v1692
    %2038 = vmatpush.bf16.msra.mxu0 %v1684
    %2039 = vmatpush.bf16.msra.mxu0 %v1676
    %2040 = vmatmul.bf16.gmra.mxu0 %v1140
    %v2041 = vpop.f32.mrf.mxu0
    %v2042 = vadd.f32 %v1276, %v2041
    %v2043 = vpop.f32.mrf.mxu0
    %2044 = vdwg.mxu0
    %2045 = vmatpush.bf16.msra.mxu0 %v1796
    %2046 = vmatpush.bf16.msra.mxu0 %v1788
    %2047 = vmatpush.bf16.msra.mxu0 %v1780
    %2048 = vmatpush.bf16.msra.mxu0 %v1772
    %2049 = vmatpush.bf16.msra.mxu0 %v1764
    %2050 = vmatpush.bf16.msra.mxu0 %v1756
    %2051 = vmatpush.bf16.msra.mxu0 %v1748
    %2052 = vmatpush.bf16.msra.mxu0 %v1740
    %2053 = vmatmul.bf16.gmra.mxu0 %v1141
    %v2054 = vpop.f32.mrf.mxu0
    %v2055 = vadd.f32 %v2042, %v2054
    %v2056 = vpop.f32.mrf.mxu0
    %2057 = vdwg.mxu0
    %2058 = vmatpush.bf16.msra.mxu0 %v1733
    %2059 = vmatpush.bf16.msra.mxu0 %v1725
    %2060 = vmatpush.bf16.msra.mxu0 %v1717
    %2061 = vmatpush.bf16.msra.mxu0 %v1709
    %2062 = vmatpush.bf16.msra.mxu0 %v1701
    %2063 = vmatpush.bf16.msra.mxu0 %v1693
    %2064 = vmatpush.bf16.msra.mxu0 %v1685
    %2065 = vmatpush.bf16.msra.mxu0 %v1677
    %2066 = vmatmul.bf16.gmra.mxu0 %v1140
    %v2067 = vpop.f32.mrf.mxu0
    %v2068 = vadd.f32 %v1277, %v2067
    %v2069 = vpop.f32.mrf.mxu0
    %2070 = vdwg.mxu0
    %2071 = vmatpush.bf16.msra.mxu0 %v1797
    %2072 = vmatpush.bf16.msra.mxu0 %v1789
    %2073 = vmatpush.bf16.msra.mxu0 %v1781
    %2074 = vmatpush.bf16.msra.mxu0 %v1773
    %2075 = vmatpush.bf16.msra.mxu0 %v1765
    %2076 = vmatpush.bf16.msra.mxu0 %v1757
    %2077 = vmatpush.bf16.msra.mxu0 %v1749
    %2078 = vmatpush.bf16.msra.mxu0 %v1741
    %2079 = vmatmul.bf16.gmra.mxu0 %v1141
    %v2080 = vpop.f32.mrf.mxu0
    %v2081 = vadd.f32 %v2068, %v2080
    %v2082 = vpop.f32.mrf.mxu0
    %2083 = vdwg.mxu0
    %2084 = vmatpush.bf16.msra.mxu0 %v1734
    %2085 = vmatpush.bf16.msra.mxu0 %v1726
    %2086 = vmatpush.bf16.msra.mxu0 %v1718
    %2087 = vmatpush.bf16.msra.mxu0 %v1710
    %2088 = vmatpush.bf16.msra.mxu0 %v1702
    %2089 = vmatpush.bf16.msra.mxu0 %v1694
    %2090 = vmatpush.bf16.msra.mxu0 %v1686
    %2091 = vmatpush.bf16.msra.mxu0 %v1678
    %2092 = vmatmul.bf16.gmra.mxu0 %v1140
    %v2093 = vpop.f32.mrf.mxu0
    %v2094 = vadd.f32 %v1278, %v2093
    %v2095 = vpop.f32.mrf.mxu0
    %2096 = vdwg.mxu0
    %2097 = vmatpush.bf16.msra.mxu0 %v1798
    %2098 = vmatpush.bf16.msra.mxu0 %v1790
    %2099 = vmatpush.bf16.msra.mxu0 %v1782
    %2100 = vmatpush.bf16.msra.mxu0 %v1774
    %2101 = vmatpush.bf16.msra.mxu0 %v1766
    %2102 = vmatpush.bf16.msra.mxu0 %v1758
    %2103 = vmatpush.bf16.msra.mxu0 %v1750
    %2104 = vmatpush.bf16.msra.mxu0 %v1742
    %2105 = vmatmul.bf16.gmra.mxu0 %v1141
    %v2106 = vpop.f32.mrf.mxu0
    %v2107 = vadd.f32 %v2094, %v2106
    %v2108 = vpop.f32.mrf.mxu0
    %2109 = vdwg.mxu0
    %2110 = vmatpush.bf16.msra.mxu0 %v1735
    %2111 = vmatpush.bf16.msra.mxu0 %v1727
    %2112 = vmatpush.bf16.msra.mxu0 %v1719
    %2113 = vmatpush.bf16.msra.mxu0 %v1711
    %2114 = vmatpush.bf16.msra.mxu0 %v1703
    %2115 = vmatpush.bf16.msra.mxu0 %v1695
    %2116 = vmatpush.bf16.msra.mxu0 %v1687
    %2117 = vmatpush.bf16.msra.mxu0 %v1679
    %2118 = vmatmul.bf16.gmra.mxu0 %v1140
    %v2119 = vpop.f32.mrf.mxu0
    %v2120 = vadd.f32 %v1279, %v2119
    %v2121 = vpop.f32.mrf.mxu0
    %2122 = vdwg.mxu0
    %2123 = vmatpush.bf16.msra.mxu0 %v1799
    %2124 = vmatpush.bf16.msra.mxu0 %v1791
    %2125 = vmatpush.bf16.msra.mxu0 %v1783
    %2126 = vmatpush.bf16.msra.mxu0 %v1775
    %2127 = vmatpush.bf16.msra.mxu0 %v1767
    %2128 = vmatpush.bf16.msra.mxu0 %v1759
    %2129 = vmatpush.bf16.msra.mxu0 %v1751
    %2130 = vmatpush.bf16.msra.mxu0 %v1743
    %2131 = vmatmul.bf16.gmra.mxu0 %v1141
    %v2132 = vpop.f32.mrf.mxu0
    %v2133 = vadd.f32 %v2120, %v2132
    %v2134 = vpop.f32.mrf.mxu0
    %2135 = vdwg.mxu0
    %v2144 = vrot.slane %v1977, 6
    %v2145 = vrot.slane %v2003, 4
    %v2146 = vrot.slane %v2029, 2
    %v2147 = vrot.slane %v2081, 6
    %v2148 = vrot.slane %v2107, 4
    %v2149 = vrot.slane %v2133, 2
    %vm2150 = vcmask 1041408
    %v2151 = vsel %vm2150, %v1951, %v2144
    %vm2152 = vcmask 1045508
    %v2153 = vsel %vm2152, %v2145, %v2146
    %v2154 = vsel %vm885, %v2151, %v2153
    %v2155 = vsel %vm2150, %v2055, %v2147
    %v2156 = vsel %vm2152, %v2148, %v2149
    %v2157 = vsel %vm885, %v2155, %v2156
    %2160 = vst [vmem:[#allocation11] sm:$0xff] %v2154
    %2161 = vst [vmem:[#allocation11 + $0x8] sm:$0xff] %v2157
    // Predicated region
    $region42: #{tpu_custom_call.1} parent=1 // pred_check
      _
    $region43: #{tpu_custom_call.1} parent=1 // pred_check_branch
      %2163 = sbr.rel (0) target = $region45
    $region44: #{tpu_custom_call.1} parent=1 // pred_region
      %2165 = vsyncadd [#allocation4], 0
      %s2167 = sshll.u32 [#allocation11], 4
      %s2168 = int_to_ptr.vmem [resolvable:$true] %s2167
      %s2169 = sshll.u32 %s5, 4
      %s2170 = int_to_ptr.hbm [resolvable:$true] %s2169
      %2172 = dma.vmem_to_hbm [thread:$0]  %s2168, 256, %s2170, [#allocation4]
    $region45: #{tpu_custom_call.1} parent=1 // pred_fallthru
      _
    // Predicated region
    $region46: #{tpu_custom_call.1} parent=1 // pred_check
      _
    $region47: #{tpu_custom_call.1} parent=1 // pred_check_branch
      %2174 = sbr.rel (0) target = $region49
    $region48: #{tpu_custom_call.1} parent=1 // pred_region
      %2176 = dma.done [#allocation4], 256
    $region49: #{tpu_custom_call.1} parent=1 // pred_fallthru
      _
    %2177 = vsyncpa [#allocation3], 1
    %2178 = vsyncpa [#allocation6], 1
    %2179 = vsyncpa [#allocation9], 1
    %2180 = vsyncpa [#allocation4], 1

</llo_original>
